<compile_context>
chip_gen: v5e
topology: v5e:2x2
jax: 0.10.0
libtpu: 0.0.40
codegen_flags: <defaults>
</compile_context>

<pallas_src>
import jax
import jax.numpy as jnp
import numpy as np
from jax.experimental import pallas as pl
from jax.experimental.pallas import tpu as pltpu


def _make_tfa_kernel(nt, s, c, hid, pb, neg_slope=0.01):
    rows = nt * s                 # rows handled per grid step (whole sequences)
    pbc = pb * c
    pbh = pb * hid
    NEG = float(jnp.finfo(jnp.float32).min)   # stand-in for -inf padding of MaxPool1d
    hw_roll = (rows % 8 == 0)                 # sublane-aligned -> single XLU rotate

    def _roll(v, shift):
        if hw_roll:
            return pltpu.roll(v, shift % rows, axis=0)
        return jnp.roll(v, shift, axis=0)

    def kernel(x_ref, w1_ref, w2a_ref, w2b_ref, out_ref):
        x = x_ref[...].astype(jnp.float32)                      # [rows, pbc]
        bf = lambda v: v.astype(jnp.bfloat16)

        # (rows, 1) s-periodic sequence-boundary masks; broadcast along lanes in where().
        ss = jax.lax.broadcasted_iota(jnp.int32, (rows, 1), 0) % s
        lo1, lo2 = ss < 1, ss < 2
        hi1, hi2 = ss >= s - 1, ss >= s - 2

        # Each circular roll (sublane axis, XLU) is computed once; the zero-filled
        # (conv / avg-pool) and -inf-filled (max-pool) variants share it.
        r_p1 = _roll(x, 1)        # value at t-1
        r_m1 = _roll(x, -1)       # value at t+1
        r_p2 = _roll(x, 2)
        r_m2 = _roll(x, -2)

        z_p1 = jnp.where(lo1, 0.0, r_p1)
        z_m1 = jnp.where(hi1, 0.0, r_m1)
        z_p2 = jnp.where(lo2, 0.0, r_p2)
        z_m2 = jnp.where(hi2, 0.0, r_m2)
        m_p1 = jnp.where(lo1, NEG, r_p1)
        m_m1 = jnp.where(hi1, NEG, r_m1)
        m_p2 = jnp.where(lo2, NEG, r_p2)
        m_m2 = jnp.where(hi2, NEG, r_m2)

        # AvgPool (count_include_pad=True) + MaxPool (-inf pad), lane-dense f32 VPU math.
        pool3 = (z_p1 + x + z_m1) * (1.0 / 3.0) \
              + jnp.maximum(jnp.maximum(m_p1, x), m_m1)
        pool5 = (z_p2 + z_p1 + x + z_m1 + z_m2) * (1.0 / 5.0) \
              + jnp.maximum(jnp.maximum(jnp.maximum(m_p2, m_p1),
                                        jnp.maximum(m_m1, m_m2)), x)

        leaky = lambda v: jnp.where(v >= 0, v, neg_slope * v)   # nn.LeakyReLU default slope

        # First conv of BOTH branches: 3 accumulating block-diagonal bf16 matmuls
        # (one per temporal tap) -- no [rows, 3*pbc] concat copy of the input.
        h = (jnp.dot(bf(z_p1), w1_ref[0, 0], preferred_element_type=jnp.float32)
             + jnp.dot(bf(x),    w1_ref[0, 1], preferred_element_type=jnp.float32)
             + jnp.dot(bf(z_m1), w1_ref[0, 2], preferred_element_type=jnp.float32))
        h = leaky(h)                                            # [rows, 2*pbh]
        ha = h[:, :pbh]                                         # 3x1-branch hidden
        hb = h[:, pbh:]                                         # 3x3-branch hidden

        # 3x1 branch second layer: 1x1 conv -> one block-diag matmul (K = pbh).
        logits_a = jnp.dot(bf(ha), w2a_ref[0], preferred_element_type=jnp.float32)

        # 3x3 branch second layer: 3 taps fused into ONE matmul (K = 3*pbh) by
        # stacking the rolled+masked hidden features along lanes.
        hb_p1 = jnp.where(lo1, 0.0, _roll(hb, 1))
        hb_m1 = jnp.where(hi1, 0.0, _roll(hb, -1))
        hb_cat = jnp.concatenate([bf(hb_p1), bf(hb), bf(hb_m1)], axis=1)  # [rows, 3*pbh]
        logits_b = jnp.dot(hb_cat, w2b_ref[0], preferred_element_type=jnp.float32)

        # Sigmoid gating + branch sum (f32), max over time per sequence, lane-dense store.
        y = pool3 * jax.nn.sigmoid(logits_a) + pool5 * jax.nn.sigmoid(logits_b)   # [rows, pbc]
        out_ref[...] = jnp.max(y.reshape(nt, s, pbc), axis=1).astype(out_ref.dtype)

    return kernel


def temporal_feature_aggregator(x, w1_3x1, w2_3x1, w1_3x3, w2_3x3):
    """x: [n, s, c, p] f32; Conv1d weights (PyTorch [out, in, k] layout) stacked over parts."""
    n, s, c, p = x.shape
    hid = w1_3x1.shape[1]
    ns = n * s

    # ---- part-block selection (lane axis) ----
    # Largest pb dividing p with pb*c lane-dense (multiple of 128), capped so the
    # block-diagonal contraction stays narrow (128 lanes when the problem is big
    # enough to be MXU-bound, else 256 -> 2 part blocks feed both v7x TCs).
    pbc_cap = 128 if ns >= 2048 else 256
    pb = None
    for cand in range(p, 0, -1):
        if p % cand == 0 and (cand * c) % 128 == 0 and cand * c <= pbc_cap:
            pb = cand
            break
    if pb is None:
        pb = p   # TODO(synk): pad the part axis to a 128-multiple lane width instead
    nblk = p // pb
    pbc, pbh = pb * c, pb * hid

    # ---- ns (batch*time) tiling (sublane axis) ----
    # Whole sequences per tile (keeps boundary masks valid); tiles must keep
    # sublane blocks 8-aligned (or cover the full batch).  Target 512-1024 rows
    # so the working set fits the default scoped VMEM on every generation
    # (v7x: 64 MiB physical / 32 MiB default scoped).
    cands = [d for d in range(1, n + 1)
             if n % d == 0 and (d == n or (d % 8 == 0 and (d * s) % 8 == 0))]

    def _tile_rank(d):
        r = d * s
        if 512 <= r <= 1024:
            return (0, r)       # ideal band: smallest within it
        if r < 512:
            return (1, -r)      # else: biggest tile below the band
        return (2, r)           # else: smallest tile above the band

    nt = min(cands, key=_tile_rank)
    n_tiles = n // nt

    # ---------------- layout glue (tiny XLA ops, run once per call) ----------------
    # activations: [n*s, p*c] -- time on sublanes, (part, channel) on lanes.
    x_k = jnp.transpose(x, (0, 1, 3, 2)).reshape(ns, p * c)

    eye = jnp.eye(pb, dtype=jnp.float32)

    def make_block(i):
        sl = slice(i * pb, (i + 1) * pb)
        a1, b1 = w1_3x1[sl], w1_3x3[sl]          # [pb, hid, c, 3]
        a2, b2 = w2_3x1[sl], w2_3x3[sl]          # [pb, c, hid], [pb, c, hid, 3]
        # first layer (both branches), per tap: rows = (part, in_chan), cols = (branch, part, hid)
        wa = jnp.einsum('pq,phck->kpcqh', eye, a1).reshape(3, pbc, pbh)
        wb = jnp.einsum('pq,phck->kpcqh', eye, b1).reshape(3, pbc, pbh)
        w1 = jnp.concatenate([wa, wb], axis=2)                           # [3, pbc, 2*pbh]
        # second layer, 3x1 branch (1x1 conv): rows = (part, hid), cols = (part, out_chan)
        w2a = jnp.einsum('pq,pch->phqc', eye, a2).reshape(pbh, pbc)      # [pbh, pbc]
        # second layer, 3x3 branch: the 3 taps fused along the contraction axis
        w2b = jnp.einsum('pq,pchk->kphqc', eye, b2).reshape(3 * pbh, pbc)
        return w1, w2a, w2b

    blocks = [make_block(i) for i in range(nblk)]
    # MXU operands in bf16 (native speed on every generation); accumulation stays f32.
    w1_all = jnp.stack([b[0] for b in blocks]).astype(jnp.bfloat16)   # [nblk, 3, pbc, 2*pbh]
    w2a_all = jnp.stack([b[1] for b in blocks]).astype(jnp.bfloat16)  # [nblk, pbh, pbc]
    w2b_all = jnp.stack([b[2] for b in blocks]).astype(jnp.bfloat16)  # [nblk, 3*pbh, pbc]

    kernel = _make_tfa_kernel(nt, s, c, hid, pb)
    out = pl.pallas_call(
        kernel,
        out_shape=jax.ShapeDtypeStruct((n, p * c), jnp.float32),
        grid_spec=pltpu.PrefetchScalarGridSpec(
            num_scalar_prefetch=0,
            # grid = (part_block, ns_tile); ns_tile innermost so the per-block
            # weights (index_map depends only on i) stay VMEM-resident across it.
            grid=(nblk, n_tiles),
            in_specs=[
                pl.BlockSpec((nt * s, pbc), lambda i, j: (j, i)),
                pl.BlockSpec((1, 3, pbc, 2 * pbh), lambda i, j: (i, 0, 0, 0)),
                pl.BlockSpec((1, pbh, pbc), lambda i, j: (i, 0, 0)),
                pl.BlockSpec((1, 3 * pbh, pbc), lambda i, j: (i, 0, 0)),
            ],
            out_specs=pl.BlockSpec((nt, pbc), lambda i, j: (j, i)),
        ),
        compiler_params=pltpu.CompilerParams(
            dimension_semantics=("parallel", "parallel")),
    )(x_k, w1_all, w2a_all, w2b_all)                  # [n, p*c]
    return out.reshape(n, p, c)                       # free reshape, no transpose


# ----------------------- pure-JAX reference (for verification) -----------------------
def _conv1d_ref(x, w, pad):
    # x: [p, n, ci, s], w: [p, co, ci, k] -> [p, n, co, s]
    s_ = x.shape[-1]
    k = w.shape[-1]
    xpad = jnp.pad(x, ((0, 0), (0, 0), (0, 0), (pad, pad)))
    out = 0.0
    for kk in range(k):
        out = out + jnp.einsum('poi,pnis->pnos', w[..., kk], xpad[..., kk:kk + s_],
                               precision=jax.lax.Precision.HIGHEST)
    return out


def _pool_avg_ref(x, k, pad):
    s_ = x.shape[-1]
    xpad = jnp.pad(x, ((0, 0), (0, 0), (0, 0), (pad, pad)))
    return sum(xpad[..., i:i + s_] for i in range(k)) / k


def _pool_max_ref(x, k, pad):
    s_ = x.shape[-1]
    xpad = jnp.pad(x, ((0, 0), (0, 0), (0, 0), (pad, pad)), constant_values=-jnp.inf)
    out = xpad[..., 0:s_]
    for i in range(1, k):
        out = jnp.maximum(out, xpad[..., i:i + s_])
    return out


def temporal_feature_aggregator_ref(x, w1a, w2a, w1b, w2b):
    xp = jnp.transpose(x, (3, 0, 2, 1))               # [p, n, c, s]
    leaky = lambda v: jnp.where(v >= 0, v, 0.01 * v)

    h1 = leaky(_conv1d_ref(xp, w1a, 1))
    scores_a = jax.nn.sigmoid(_conv1d_ref(h1, w2a[..., None], 0))
    fa = (_pool_avg_ref(xp, 3, 1) + _pool_max_ref(xp, 3, 1)) * scores_a

    h2 = leaky(_conv1d_ref(xp, w1b, 1))
    scores_b = jax.nn.sigmoid(_conv1d_ref(h2, w2b, 1))
    fb = (_pool_avg_ref(xp, 5, 2) + _pool_max_ref(xp, 5, 2)) * scores_b

    ret = jnp.max(fa + fb, axis=-1)                   # [p, n, c]
    return jnp.transpose(ret, (1, 0, 2))              # [n, p, c]


if __name__ == "__main__":
    # n=2 batch, s=8 frames, c=32 channels, parts_num p=16, squeeze=4 -> hidden=8
    n, s, c, p, squeeze = 2, 8, 32, 16, 4
    hid = c // squeeze

    key = jax.random.PRNGKey(0)
    kx, k1, k2, k3, k4 = jax.random.split(key, 5)
    x = jax.random.normal(kx, (n, s, c, p), jnp.float32)
    # Deterministic synthetic weights (PyTorch Conv1d layout [out, in, k], stacked over parts).
    # NOTE: clones() would give all parts identical initial weights; distinct per-part
    # weights (same parameter shapes) are the more general case and are used here.
    w1_3x1 = jax.random.normal(k1, (p, hid, c, 3), jnp.float32) * (1.0 / np.sqrt(3 * c))
    w2_3x1 = jax.random.normal(k2, (p, c, hid), jnp.float32) * (1.0 / np.sqrt(hid))
    w1_3x3 = jax.random.normal(k3, (p, hid, c, 3), jnp.float32) * (1.0 / np.sqrt(3 * c))
    w2_3x3 = jax.random.normal(k4, (p, c, hid, 3), jnp.float32) * (1.0 / np.sqrt(3 * hid))

    fn = jax.jit(temporal_feature_aggregator)
    out = jax.block_until_ready(fn(x, w1_3x1, w2_3x1, w1_3x3, w2_3x3))

    ref = jax.block_until_ready(
        temporal_feature_aggregator_ref(x, w1_3x1, w2_3x1, w1_3x3, w2_3x3))

    assert out.shape == (n, p, c), out.shape
    max_err = float(jnp.max(jnp.abs(out - ref)))
    assert max_err < 5e-2, f"mismatch vs reference: max abs err {max_err}"
    print("KERNEL_OK")
</pallas_src>

<mosaic_0001>
module attributes {stable_mosaic.version = 11 : i64} {
  func.func @kernel(%arg0: i32, %arg1: i32, %arg2: memref<16x256xf32, #tpu.memory_space<vmem>>, %arg3: memref<1x3x256x128xbf16, #tpu.memory_space<vmem>>, %arg4: memref<1x64x256xbf16, #tpu.memory_space<vmem>>, %arg5: memref<1x192x256xbf16, #tpu.memory_space<vmem>>, %arg6: memref<2x256xf32, #tpu.memory_space<vmem>>) attributes {dimension_semantics = [#tpu.dimension_semantics<parallel>, #tpu.dimension_semantics<parallel>], iteration_bounds = array<i64: 2, 1>, scalar_prefetch = 0 : i64, scratch_operands = 0 : i64, tpu.core_type = #tpu.core_type<tc>, window_params = [{transform_indices = @transform_0, window_bounds = array<i64: 16, 256>}, {transform_indices = @transform_1, window_bounds = array<i64: 1, 3, 256, 128>}, {transform_indices = @transform_2, window_bounds = array<i64: 1, 64, 256>}, {transform_indices = @transform_3, window_bounds = array<i64: 1, 192, 256>}, {transform_indices = @transform_4, window_bounds = array<i64: 2, 256>}]} {
    %c0 = arith.constant 0 : index
    %c0_0 = arith.constant 0 : index
    %0 = vector.load %arg2[%c0, %c0_0] : memref<16x256xf32, #tpu.memory_space<vmem>>, vector<16x256xf32>
    %1 = tpu.iota {dimensions = array<i32: 0>} : vector<16x1xi32>
    %c8_i32 = arith.constant 8 : i32
    %c0_i32 = arith.constant 0 : i32
    %2 = arith.cmpi eq, %c8_i32, %c0_i32 : i32
    %c1_i32 = arith.constant 1 : i32
    %3 = arith.select %2, %c1_i32, %c8_i32 : i32
    %4 = vector.broadcast %3 : i32 to vector<16x1xi32>
    %5 = arith.remsi %1, %4 : vector<16x1xi32>
    %c0_i32_1 = arith.constant 0 : i32
    %6 = vector.broadcast %c0_i32_1 : i32 to vector<16x1xi32>
    %7 = arith.cmpi ne, %5, %6 : vector<16x1xi32>
    %c0_i32_2 = arith.constant 0 : i32
    %8 = vector.broadcast %c0_i32_2 : i32 to vector<16x1xi32>
    %9 = arith.cmpi slt, %5, %8 : vector<16x1xi32>
    %c0_i32_3 = arith.constant 0 : i32
    %10 = arith.cmpi slt, %3, %c0_i32_3 : i32
    %11 = vector.broadcast %10 : i1 to vector<16x1xi1>
    %12 = vector.broadcast %11 : vector<16x1xi1> to vector<16x1xi1>
    %13 = arith.xori %9, %12 : vector<16x1xi1>
    %14 = arith.andi %13, %7 : vector<16x1xi1>
    %15 = vector.broadcast %3 : i32 to vector<16x1xi32>
    %16 = arith.addi %5, %15 : vector<16x1xi32>
    %17 = arith.select %14, %16, %5 : vector<16x1xi1>, vector<16x1xi32>
    %c1_i32_4 = arith.constant 1 : i32
    %18 = vector.broadcast %c1_i32_4 : i32 to vector<16x1xi32>
    %19 = arith.cmpi slt, %17, %18 : vector<16x1xi32>
    %c2_i32 = arith.constant 2 : i32
    %20 = vector.broadcast %c2_i32 : i32 to vector<16x1xi32>
    %21 = arith.cmpi slt, %17, %20 : vector<16x1xi32>
    %c7_i32 = arith.constant 7 : i32
    %22 = vector.broadcast %c7_i32 : i32 to vector<16x1xi32>
    %23 = arith.cmpi sge, %17, %22 : vector<16x1xi32>
    %c6_i32 = arith.constant 6 : i32
    %24 = vector.broadcast %c6_i32 : i32 to vector<16x1xi32>
    %25 = arith.cmpi sge, %17, %24 : vector<16x1xi32>
    %c1_i32_5 = arith.constant 1 : i32
    %26 = tpu.dynamic_rotate %0 by %c1_i32_5 dim 0 : vector<16x256xf32>, i32 -> vector<16x256xf32>
    %c15_i32 = arith.constant 15 : i32
    %27 = tpu.dynamic_rotate %0 by %c15_i32 dim 0 : vector<16x256xf32>, i32 -> vector<16x256xf32>
    %c2_i32_6 = arith.constant 2 : i32
    %28 = tpu.dynamic_rotate %0 by %c2_i32_6 dim 0 : vector<16x256xf32>, i32 -> vector<16x256xf32>
    %c14_i32 = arith.constant 14 : i32
    %29 = tpu.dynamic_rotate %0 by %c14_i32 dim 0 : vector<16x256xf32>, i32 -> vector<16x256xf32>
    %cst = arith.constant 0.000000e+00 : f32
    %30 = vector.shape_cast %19 : vector<16x1xi1> to vector<16x1xi1>
    %31 = vector.broadcast %30 : vector<16x1xi1> to vector<16x256xi1>
    %32 = vector.broadcast %cst : f32 to vector<16x256xf32>
    %33 = arith.select %31, %32, %26 : vector<16x256xi1>, vector<16x256xf32>
    %cst_7 = arith.constant 0.000000e+00 : f32
    %34 = vector.shape_cast %23 : vector<16x1xi1> to vector<16x1xi1>
    %35 = vector.broadcast %34 : vector<16x1xi1> to vector<16x256xi1>
    %36 = vector.broadcast %cst_7 : f32 to vector<16x256xf32>
    %37 = arith.select %35, %36, %27 : vector<16x256xi1>, vector<16x256xf32>
    %cst_8 = arith.constant 0.000000e+00 : f32
    %38 = vector.shape_cast %21 : vector<16x1xi1> to vector<16x1xi1>
    %39 = vector.broadcast %38 : vector<16x1xi1> to vector<16x256xi1>
    %40 = vector.broadcast %cst_8 : f32 to vector<16x256xf32>
    %41 = arith.select %39, %40, %28 : vector<16x256xi1>, vector<16x256xf32>
    %cst_9 = arith.constant 0.000000e+00 : f32
    %42 = vector.shape_cast %25 : vector<16x1xi1> to vector<16x1xi1>
    %43 = vector.broadcast %42 : vector<16x1xi1> to vector<16x256xi1>
    %44 = vector.broadcast %cst_9 : f32 to vector<16x256xf32>
    %45 = arith.select %43, %44, %29 : vector<16x256xi1>, vector<16x256xf32>
    %cst_10 = arith.constant -3.40282347E+38 : f32
    %46 = vector.shape_cast %19 : vector<16x1xi1> to vector<16x1xi1>
    %47 = vector.broadcast %46 : vector<16x1xi1> to vector<16x256xi1>
    %48 = vector.broadcast %cst_10 : f32 to vector<16x256xf32>
    %49 = arith.select %47, %48, %26 : vector<16x256xi1>, vector<16x256xf32>
    %cst_11 = arith.constant -3.40282347E+38 : f32
    %50 = vector.shape_cast %23 : vector<16x1xi1> to vector<16x1xi1>
    %51 = vector.broadcast %50 : vector<16x1xi1> to vector<16x256xi1>
    %52 = vector.broadcast %cst_11 : f32 to vector<16x256xf32>
    %53 = arith.select %51, %52, %27 : vector<16x256xi1>, vector<16x256xf32>
    %cst_12 = arith.constant -3.40282347E+38 : f32
    %54 = vector.shape_cast %21 : vector<16x1xi1> to vector<16x1xi1>
    %55 = vector.broadcast %54 : vector<16x1xi1> to vector<16x256xi1>
    %56 = vector.broadcast %cst_12 : f32 to vector<16x256xf32>
    %57 = arith.select %55, %56, %28 : vector<16x256xi1>, vector<16x256xf32>
    %cst_13 = arith.constant -3.40282347E+38 : f32
    %58 = vector.shape_cast %25 : vector<16x1xi1> to vector<16x1xi1>
    %59 = vector.broadcast %58 : vector<16x1xi1> to vector<16x256xi1>
    %60 = vector.broadcast %cst_13 : f32 to vector<16x256xf32>
    %61 = arith.select %59, %60, %29 : vector<16x256xi1>, vector<16x256xf32>
    %62 = arith.addf %33, %0 : vector<16x256xf32>
    %63 = arith.addf %62, %37 : vector<16x256xf32>
    %cst_14 = arith.constant 0.333333343 : f32
    %64 = vector.broadcast %cst_14 : f32 to vector<16x256xf32>
    %65 = arith.mulf %63, %64 : vector<16x256xf32>
    %66 = arith.maximumf %49, %0 : vector<16x256xf32>
    %67 = arith.maximumf %66, %53 : vector<16x256xf32>
    %68 = arith.addf %65, %67 : vector<16x256xf32>
    %69 = arith.addf %41, %33 : vector<16x256xf32>
    %70 = arith.addf %69, %0 : vector<16x256xf32>
    %71 = arith.addf %70, %37 : vector<16x256xf32>
    %72 = arith.addf %71, %45 : vector<16x256xf32>
    %cst_15 = arith.constant 2.000000e-01 : f32
    %73 = vector.broadcast %cst_15 : f32 to vector<16x256xf32>
    %74 = arith.mulf %72, %73 : vector<16x256xf32>
    %75 = arith.maximumf %57, %49 : vector<16x256xf32>
    %76 = arith.maximumf %53, %61 : vector<16x256xf32>
    %77 = arith.maximumf %75, %76 : vector<16x256xf32>
    %78 = arith.maximumf %77, %0 : vector<16x256xf32>
    %79 = arith.addf %74, %78 : vector<16x256xf32>
    %80 = arith.truncf %33 : vector<16x256xf32> to vector<16x256xbf16>
    %c0_16 = arith.constant 0 : index
    %c0_17 = arith.constant 0 : index
    %c0_18 = arith.constant 0 : index
    %c0_19 = arith.constant 0 : index
    %81 = vector.load %arg3[%c0_16, %c0_17, %c0_18, %c0_19] : memref<1x3x256x128xbf16, #tpu.memory_space<vmem>>, vector<1x1x256x128xbf16>
    %82 = vector.shape_cast %81 : vector<1x1x256x128xbf16> to vector<256x128xbf16>
    %cst_20 = arith.constant dense<0.000000e+00> : vector<16x128xf32>
    %83 = tpu.matmul %80, %82, %cst_20 {dimension_numbers = #tpu.dot_dimension_numbers<[1], [0], [0], [1], [0, 0, 1, 1], [], []>} : vector<16x256xbf16>, vector<256x128xbf16>, vector<16x128xf32> -> vector<16x128xf32>
    %84 = arith.truncf %0 : vector<16x256xf32> to vector<16x256xbf16>
    %c0_21 = arith.constant 0 : index
    %c1 = arith.constant 1 : index
    %c0_22 = arith.constant 0 : index
    %c0_23 = arith.constant 0 : index
    %85 = vector.load %arg3[%c0_21, %c1, %c0_22, %c0_23] : memref<1x3x256x128xbf16, #tpu.memory_space<vmem>>, vector<1x1x256x128xbf16>
    %86 = vector.shape_cast %85 : vector<1x1x256x128xbf16> to vector<256x128xbf16>
    %cst_24 = arith.constant dense<0.000000e+00> : vector<16x128xf32>
    %87 = tpu.matmul %84, %86, %cst_24 {dimension_numbers = #tpu.dot_dimension_numbers<[1], [0], [0], [1], [0, 0, 1, 1], [], []>} : vector<16x256xbf16>, vector<256x128xbf16>, vector<16x128xf32> -> vector<16x128xf32>
    %88 = arith.addf %83, %87 : vector<16x128xf32>
    %89 = arith.truncf %37 : vector<16x256xf32> to vector<16x256xbf16>
    %c0_25 = arith.constant 0 : index
    %c2 = arith.constant 2 : index
    %c0_26 = arith.constant 0 : index
    %c0_27 = arith.constant 0 : index
    %90 = vector.load %arg3[%c0_25, %c2, %c0_26, %c0_27] : memref<1x3x256x128xbf16, #tpu.memory_space<vmem>>, vector<1x1x256x128xbf16>
    %91 = vector.shape_cast %90 : vector<1x1x256x128xbf16> to vector<256x128xbf16>
    %cst_28 = arith.constant dense<0.000000e+00> : vector<16x128xf32>
    %92 = tpu.matmul %89, %91, %cst_28 {dimension_numbers = #tpu.dot_dimension_numbers<[1], [0], [0], [1], [0, 0, 1, 1], [], []>} : vector<16x256xbf16>, vector<256x128xbf16>, vector<16x128xf32> -> vector<16x128xf32>
    %93 = arith.addf %88, %92 : vector<16x128xf32>
    %cst_29 = arith.constant 0.000000e+00 : f32
    %94 = vector.broadcast %cst_29 : f32 to vector<16x128xf32>
    %95 = arith.cmpf oge, %93, %94 : vector<16x128xf32>
    %cst_30 = arith.constant 0.00999999977 : f32
    %96 = vector.broadcast %cst_30 : f32 to vector<16x128xf32>
    %97 = arith.mulf %96, %93 : vector<16x128xf32>
    %98 = arith.select %95, %93, %97 : vector<16x128xi1>, vector<16x128xf32>
    %99 = vector.extract_strided_slice %98 {offsets = [0, 0], sizes = [16, 64], strides = [1, 1]} : vector<16x128xf32> to vector<16x64xf32>
    %100 = vector.extract_strided_slice %98 {offsets = [0, 64], sizes = [16, 64], strides = [1, 1]} : vector<16x128xf32> to vector<16x64xf32>
    %101 = arith.truncf %99 : vector<16x64xf32> to vector<16x64xbf16>
    %c0_31 = arith.constant 0 : index
    %c0_32 = arith.constant 0 : index
    %c0_33 = arith.constant 0 : index
    %102 = vector.load %arg4[%c0_31, %c0_32, %c0_33] : memref<1x64x256xbf16, #tpu.memory_space<vmem>>, vector<1x64x256xbf16>
    %103 = vector.shape_cast %102 : vector<1x64x256xbf16> to vector<64x256xbf16>
    %cst_34 = arith.constant dense<0.000000e+00> : vector<16x256xf32>
    %104 = tpu.matmul %101, %103, %cst_34 {dimension_numbers = #tpu.dot_dimension_numbers<[1], [0], [0], [1], [0, 0, 1, 1], [], []>} : vector<16x64xbf16>, vector<64x256xbf16>, vector<16x256xf32> -> vector<16x256xf32>
    %c1_i32_35 = arith.constant 1 : i32
    %105 = tpu.dynamic_rotate %100 by %c1_i32_35 dim 0 : vector<16x64xf32>, i32 -> vector<16x64xf32>
    %cst_36 = arith.constant 0.000000e+00 : f32
    %106 = vector.shape_cast %19 : vector<16x1xi1> to vector<16x1xi1>
    %107 = vector.broadcast %106 : vector<16x1xi1> to vector<16x64xi1>
    %108 = vector.broadcast %cst_36 : f32 to vector<16x64xf32>
    %109 = arith.select %107, %108, %105 : vector<16x64xi1>, vector<16x64xf32>
    %c15_i32_37 = arith.constant 15 : i32
    %110 = tpu.dynamic_rotate %100 by %c15_i32_37 dim 0 : vector<16x64xf32>, i32 -> vector<16x64xf32>
    %cst_38 = arith.constant 0.000000e+00 : f32
    %111 = vector.shape_cast %23 : vector<16x1xi1> to vector<16x1xi1>
    %112 = vector.broadcast %111 : vector<16x1xi1> to vector<16x64xi1>
    %113 = vector.broadcast %cst_38 : f32 to vector<16x64xf32>
    %114 = arith.select %112, %113, %110 : vector<16x64xi1>, vector<16x64xf32>
    %115 = arith.truncf %109 : vector<16x64xf32> to vector<16x64xbf16>
    %116 = arith.truncf %100 : vector<16x64xf32> to vector<16x64xbf16>
    %117 = arith.truncf %114 : vector<16x64xf32> to vector<16x64xbf16>
    %118 = tpu.concatenate %115, %116, %117 in 1 : vector<16x64xbf16>, vector<16x64xbf16>, vector<16x64xbf16> -> vector<16x192xbf16>
    %c0_39 = arith.constant 0 : index
    %c0_40 = arith.constant 0 : index
    %c0_41 = arith.constant 0 : index
    %119 = vector.load %arg5[%c0_39, %c0_40, %c0_41] : memref<1x192x256xbf16, #tpu.memory_space<vmem>>, vector<1x192x256xbf16>
    %120 = vector.shape_cast %119 : vector<1x192x256xbf16> to vector<192x256xbf16>
    %cst_42 = arith.constant dense<0.000000e+00> : vector<16x256xf32>
    %121 = tpu.matmul %118, %120, %cst_42 {dimension_numbers = #tpu.dot_dimension_numbers<[1], [0], [0], [1], [0, 0, 1, 1], [], []>} : vector<16x192xbf16>, vector<192x256xbf16>, vector<16x256xf32> -> vector<16x256xf32>
    %122 = arith.negf %104 : vector<16x256xf32>
    %123 = math.exp %122 : vector<16x256xf32>
    %cst_43 = arith.constant 1.000000e+00 : f32
    %124 = vector.broadcast %cst_43 : f32 to vector<16x256xf32>
    %125 = arith.addf %124, %123 : vector<16x256xf32>
    %126 = arith.divf %124, %125 : vector<16x256xf32>
    %127 = arith.mulf %68, %126 : vector<16x256xf32>
    %128 = arith.negf %121 : vector<16x256xf32>
    %129 = math.exp %128 : vector<16x256xf32>
    %cst_44 = arith.constant 1.000000e+00 : f32
    %130 = vector.broadcast %cst_44 : f32 to vector<16x256xf32>
    %131 = arith.addf %130, %129 : vector<16x256xf32>
    %132 = arith.divf %130, %131 : vector<16x256xf32>
    %133 = arith.mulf %79, %132 : vector<16x256xf32>
    %134 = arith.addf %127, %133 : vector<16x256xf32>
    %135 = vector.shape_cast %134 : vector<16x256xf32> to vector<2x8x256xf32>
    %cst_45 = arith.constant dense<0xFF800000> : vector<2x256xf32>
    %136 = vector.multi_reduction <maximumf>, %135, %cst_45 [1] : vector<2x8x256xf32> to vector<2x256xf32>
    %c0_46 = arith.constant 0 : index
    %c0_47 = arith.constant 0 : index
    %137 = vector.load %arg6[%c0_46, %c0_47] : memref<2x256xf32, #tpu.memory_space<vmem>>, vector<2x256xf32>
    tpu.vector_store %arg6[%c0_46, %c0_47], %136 {strides = array<i32>} : memref<2x256xf32, #tpu.memory_space<vmem>>, vector<2x256xf32>,
    return
  }
  func.func @transform_0(%arg0: i32, %arg1: i32) -> (i32, i32) {
    %c0_i32 = arith.constant 0 : i32
    return %arg1, %arg0 : i32, i32
  }
  func.func @transform_1(%arg0: i32, %arg1: i32) -> (i32, i32, i32, i32) {
    %c0_i32 = arith.constant 0 : i32
    %c0_i32_0 = arith.constant 0 : i32
    %c0_i32_1 = arith.constant 0 : i32
    %c0_i32_2 = arith.constant 0 : i32
    return %arg0, %c0_i32, %c0_i32_0, %c0_i32_1 : i32, i32, i32, i32
  }
  func.func @transform_2(%arg0: i32, %arg1: i32) -> (i32, i32, i32) {
    %c0_i32 = arith.constant 0 : i32
    %c0_i32_0 = arith.constant 0 : i32
    %c0_i32_1 = arith.constant 0 : i32
    return %arg0, %c0_i32, %c0_i32_0 : i32, i32, i32
  }
  func.func @transform_3(%arg0: i32, %arg1: i32) -> (i32, i32, i32) {
    %c0_i32 = arith.constant 0 : i32
    %c0_i32_0 = arith.constant 0 : i32
    %c0_i32_1 = arith.constant 0 : i32
    return %arg0, %c0_i32, %c0_i32_0 : i32, i32, i32
  }
  func.func @transform_4(%arg0: i32, %arg1: i32) -> (i32, i32) {
    %c0_i32 = arith.constant 0 : i32
    return %arg1, %arg0 : i32, i32
  }
}

</mosaic_0001>

<llo_original>
// kernel: temporal_feature_aggregator.1
$region0: #{temporal_feature_aggregator.1}
  #allocation0 [shape = 'u32[]', space=smem, size = 0x4, offset = 0x4, fixed_abs, tag = 'smem constant byte address 0x4 - core index']
  #allocation1 [shape = 'u32[72,128]{1,0:T(1,128)}', space=vmem, size = 0x9000, scoped, tag = 'internal scratch']
  %s0 = inlined_call_operand.vmem [shape: f32[16,512], index: 0, kind: input, shape index: {}]
  %s1 = inlined_call_operand.vmem [shape: bf16[2,3,256,128], index: 1, kind: input, shape index: {}]
  %s2 = inlined_call_operand.vmem [shape: bf16[2,64,256], index: 2, kind: input, shape index: {}]
  %s3 = inlined_call_operand.vmem [shape: bf16[2,192,256], index: 3, kind: input, shape index: {}]
  %s4 = inlined_call_operand.vmem [shape: f32[2,512], index: 4, kind: output, shape index: {}]
  %s5 = sld [smem:[#allocation0]]
  $region72: #{temporal_feature_aggregator.1} parent=0
    _
  %s7 = ssub.s32 1, %s5
  %s8 = scalar_select 0, %s7, %s5
  $region1: #{temporal_feature_aggregator.1} parent=0
    #allocation2 [shape = 'u8[32768]{0}', space=vmem, size = 0x8000, scoped, tag = 'input window, operand 0']
    loop: start=0, step=1, limit=4
    $region2: #{temporal_feature_aggregator.1} parent=1 // loop_pre_header
      _
    $region3: #{temporal_feature_aggregator.1} parent=1 // loop_header
      %s10 = sphi 0, %s14
      %p11 = scmp.ge.s32.totalorder %s10, 4
      %s17 = sphi 0, %s29
      %s18 = sphi 0, %s25
      %s19 = sphi 0, %s17
      %s20 = sphi 0, %s18
      %s21 = sphi 0, %s19
      %s22 = sphi 0, %s20
      %s34 = sphi 0, %s36
      %s37 = sphi 0, %s34
      %s38 = sphi 0, %s37
      %s54 = sphi 0, %s38
      %s60 = sphi 0, %s62
      %s63 = sphi 0, %s60
      %s64 = sphi 0, %s63
      %s80 = sphi 0, %s64
      %s86 = sphi 0, %s88
      %s89 = sphi 0, %s86
      %s90 = sphi 0, %s89
      %s106 = sphi 0, %s90
      %s112 = sphi 0, %s114
      %s115 = sphi 0, %s112
      %s116 = sphi 0, %s115
      %s132 = sphi 0, %s116
      %s140 = sphi 0, %s142
      %s143 = sphi 0, %s140
      %s144 = sphi 0, %s143
      %s160 = sphi 0, %s144
    $region4: #{temporal_feature_aggregator.1} parent=1 // loop_header_branch
      %13 = sbr.rel (%p11) target = $region8
    $region5: #{temporal_feature_aggregator.1} parent=1 // loop_body
      %s15 = ssub.s32 %s10, 1
      %s16 = ssub.s32 %s10, 2
      %s23 = sadd.s32 1, %s18
      %p24 = scmp.ge.s32.totalorder %s23, 1
      %s25 = scalar_select %p24, 0, %s23
      %s26 = sadd.s32 1, %s17
      %s27 = scalar_select %p24, %s26, %s17
      %p28 = scmp.ge.s32.totalorder %s27, 2
      %s29 = scalar_select %p28, 0, %s27
      %s30 = ssub.s32 %s18, %s25
      %s31 = ssub.s32 %s17, %s29
      %s32 = sor.u32 %s30, %s31
      %p33 = scmp.eq.s32.totalorder %s32, 0
      %s35 = sadd.s32 %s34, 1
      %s36 = scalar_select %p33, %s34, %s35
      %p39 = pneg %p33
      %p40 = scmp.eq.s32.totalorder %s10, 1
      %p41 = por %p39, %p40
      %p42 = scmp.ne.s32.totalorder %s34, %s37
      %p43 = scmp.eq.s32.totalorder %s10, 0
      %p44 = por %p42, %p43
      %p45 = scmp.ne.s32.totalorder %s34, %s37
      %p46 = scmp.eq.s32.totalorder %s15, 1
      %p47 = por %p45, %p46
      %p48 = scmp.ne.s32.totalorder %s37, %s38
      %p49 = scmp.eq.s32.totalorder %s15, 0
      %p50 = por %p48, %p49
      %p51 = scmp.ne.s32.totalorder %s37, %s38
      %p52 = scmp.eq.s32.totalorder %s16, 1
      %p53 = por %p51, %p52
      %p55 = scmp.ne.s32.totalorder %s38, %s54
      %p56 = scmp.eq.s32.totalorder %s16, 0
      %p57 = por %p55, %p56
      %s58 = ssub.s32 %s17, %s29
      %p59 = scmp.eq.s32.totalorder %s58, 0
      %s61 = sadd.s32 %s60, 1
      %s62 = scalar_select %p59, %s60, %s61
      %p65 = pneg %p59
      %p66 = scmp.eq.s32.totalorder %s10, 1
      %p67 = por %p65, %p66
      %p68 = scmp.ne.s32.totalorder %s60, %s63
      %p69 = scmp.eq.s32.totalorder %s10, 0
      %p70 = por %p68, %p69
      %p71 = scmp.ne.s32.totalorder %s60, %s63
      %p72 = scmp.eq.s32.totalorder %s15, 1
      %p73 = por %p71, %p72
      %p74 = scmp.ne.s32.totalorder %s63, %s64
      %p75 = scmp.eq.s32.totalorder %s15, 0
      %p76 = por %p74, %p75
      %p77 = scmp.ne.s32.totalorder %s63, %s64
      %p78 = scmp.eq.s32.totalorder %s16, 1
      %p79 = por %p77, %p78
      %p81 = scmp.ne.s32.totalorder %s64, %s80
      %p82 = scmp.eq.s32.totalorder %s16, 0
      %p83 = por %p81, %p82
      %s84 = ssub.s32 %s17, %s29
      %p85 = scmp.eq.s32.totalorder %s84, 0
      %s87 = sadd.s32 %s86, 1
      %s88 = scalar_select %p85, %s86, %s87
      %p91 = pneg %p85
      %p92 = scmp.eq.s32.totalorder %s10, 1
      %p93 = por %p91, %p92
      %p94 = scmp.ne.s32.totalorder %s86, %s89
      %p95 = scmp.eq.s32.totalorder %s10, 0
      %p96 = por %p94, %p95
      %p97 = scmp.ne.s32.totalorder %s86, %s89
      %p98 = scmp.eq.s32.totalorder %s15, 1
      %p99 = por %p97, %p98
      %p100 = scmp.ne.s32.totalorder %s89, %s90
      %p101 = scmp.eq.s32.totalorder %s15, 0
      %p102 = por %p100, %p101
      %p103 = scmp.ne.s32.totalorder %s89, %s90
      %p104 = scmp.eq.s32.totalorder %s16, 1
      %p105 = por %p103, %p104
      %p107 = scmp.ne.s32.totalorder %s90, %s106
      %p108 = scmp.eq.s32.totalorder %s16, 0
      %p109 = por %p107, %p108
      %s110 = ssub.s32 %s17, %s29
      %p111 = scmp.eq.s32.totalorder %s110, 0
      %s113 = sadd.s32 %s112, 1
      %s114 = scalar_select %p111, %s112, %s113
      %p117 = pneg %p111
      %p118 = scmp.eq.s32.totalorder %s10, 1
      %p119 = por %p117, %p118
      %p120 = scmp.ne.s32.totalorder %s112, %s115
      %p121 = scmp.eq.s32.totalorder %s10, 0
      %p122 = por %p120, %p121
      %p123 = scmp.ne.s32.totalorder %s112, %s115
      %p124 = scmp.eq.s32.totalorder %s15, 1
      %p125 = por %p123, %p124
      %p126 = scmp.ne.s32.totalorder %s115, %s116
      %p127 = scmp.eq.s32.totalorder %s15, 0
      %p128 = por %p126, %p127
      %p129 = scmp.ne.s32.totalorder %s115, %s116
      %p130 = scmp.eq.s32.totalorder %s16, 1
      %p131 = por %p129, %p130
      %p133 = scmp.ne.s32.totalorder %s116, %s132
      %p134 = scmp.eq.s32.totalorder %s16, 0
      %p135 = por %p133, %p134
      %s136 = ssub.s32 %s18, %s25
      %s137 = ssub.s32 %s17, %s29
      %s138 = sor.u32 %s136, %s137
      %p139 = scmp.eq.s32.totalorder %s138, 0
      %s141 = sadd.s32 %s140, 1
      %s142 = scalar_select %p139, %s140, %s141
      %p145 = pneg %p139
      %p146 = scmp.eq.s32.totalorder %s10, 1
      %p147 = por %p145, %p146
      %p148 = scmp.ne.s32.totalorder %s140, %s143
      %p149 = scmp.eq.s32.totalorder %s10, 0
      %p150 = por %p148, %p149
      %p151 = scmp.ne.s32.totalorder %s140, %s143
      %p152 = scmp.eq.s32.totalorder %s15, 1
      %p153 = por %p151, %p152
      %p154 = scmp.ne.s32.totalorder %s143, %s144
      %p155 = scmp.eq.s32.totalorder %s15, 0
      %p156 = por %p154, %p155
      %p157 = scmp.ne.s32.totalorder %s143, %s144
      %p158 = scmp.eq.s32.totalorder %s16, 1
      %p159 = por %p157, %p158
      %p161 = scmp.ne.s32.totalorder %s144, %s160
      %p162 = scmp.eq.s32.totalorder %s16, 0
      %p163 = por %p161, %p162
      %p164 = scmp.le.s32.totalorder 1, %s10
      %p165 = scmp.lt.s32.totalorder %s10, 3
      %p166 = pnand %p164, %p165
      %p167 = pneg %p166
      // Predicated region
      $region9: #{temporal_feature_aggregator.1} parent=5 // pred_check
        _
      $region10: #{temporal_feature_aggregator.1} parent=5 // pred_check_branch
        %169 = sbr.rel (%p166) target = $region12
      $region11: #{temporal_feature_aggregator.1} parent=5 // pred_region
        %s170 = ssub.s32 %s10, 1
      $region12: #{temporal_feature_aggregator.1} parent=5 // pred_fallthru
        _
      %p171 = scmp.lt.s32.totalorder %s10, 2
      // Predicated region
      $region13: #{temporal_feature_aggregator.1} parent=5 // pred_check
        %p172 = pneg %p171
      $region14: #{temporal_feature_aggregator.1} parent=5 // pred_check_branch
        %174 = sbr.rel (%p172) target = $region16
      $region15: #{temporal_feature_aggregator.1} parent=5 // pred_region
        // Predicated region
        $region17: #{temporal_feature_aggregator.1} parent=15 // pred_check
          %p175 = pneg %p44
        $region18: #{temporal_feature_aggregator.1} parent=15 // pred_check_branch
          %177 = sbr.rel (%p175) target = $region20
        $region19: #{temporal_feature_aggregator.1} parent=15 // pred_region
          %s178 = sand.u32 %s34, 1
          %s179 = sand.u32 %s34, 1
          %s180 = smul.addr %s179, 32
          %s181 = scalar_lea.vmem [#allocation2], %s180
          %s182 = smul.u32 2, %s18
          %s183 = smul.u32 2, %s17
          %s184 = smul.addr %s182, 4
          %s185 = sadd.s32 %s183, %s184
          %s186 = smul.addr %s185, 8
          %s187 = scalar_lea.vmem %s0, %s186
          // Predicated region
          $region21: #{temporal_feature_aggregator.1} parent=19 // pred_check
            _
          $region22: #{temporal_feature_aggregator.1} parent=19 // pred_check_branch
            %189 = sbr.rel (0) target = $region24
          $region23: #{temporal_feature_aggregator.1} parent=19 // pred_region
            // Predicated region
            $region25: #{temporal_feature_aggregator.1} parent=23 // pred_check
              _
            $region26: #{temporal_feature_aggregator.1} parent=23 // pred_check_branch
              %191 = sbr.rel (0) target = $region28
            $region27: #{temporal_feature_aggregator.1} parent=23 // pred_region
              loop: start=0, step=1, limit=1
              $region29: #{temporal_feature_aggregator.1} parent=27 // loop_pre_header
                _
              $region30: #{temporal_feature_aggregator.1} parent=27 // loop_header
                %s193 = sphi 0, %s197
                %p194 = scmp.ge.s32.totalorder %s193, 1
                %s198 = sphi %s187, %s187
                %s199 = sphi %s181, %s181
              $region31: #{temporal_feature_aggregator.1} parent=27 // loop_header_branch
                %196 = sbr.rel (%p194) target = $region35
              $region32: #{temporal_feature_aggregator.1} parent=27 // loop_body
                %v200 = vld [vmem:[%s198] sm:$0xff]
                %201 = vst [vmem:[%s199] sm:$0xff] %v200
                %v202 = vld [vmem:[%s198 + $0x8] sm:$0xff]
                %203 = vst [vmem:[%s199 + $0x8] sm:$0xff] %v202
                %v204 = vld [vmem:[%s198 + $0x20] sm:$0xff]
                %205 = vst [vmem:[%s199 + $0x10] sm:$0xff] %v204
                %v206 = vld [vmem:[%s198 + $0x28] sm:$0xff]
                %207 = vst [vmem:[%s199 + $0x18] sm:$0xff] %v206
              $region33: #{temporal_feature_aggregator.1} parent=27 // loop_footer
                %s197 = sadd.s32 1, %s193
              $region34: #{temporal_feature_aggregator.1} parent=27 // loop_footer_branch
                %192 = sbr.rel target = $region30
              $region35: #{temporal_feature_aggregator.1} parent=27 // loop_exit
                _
            $region28: #{temporal_feature_aggregator.1} parent=23 // pred_fallthru
              _
            // Predicated region
            $region36: #{temporal_feature_aggregator.1} parent=23 // pred_check
              _
            $region37: #{temporal_feature_aggregator.1} parent=23 // pred_check_branch
              %209 = sbr.rel target = $region39
            $region38: #{temporal_feature_aggregator.1} parent=23 // pred_region
              _
            $region39: #{temporal_feature_aggregator.1} parent=23 // pred_fallthru
              _
          $region24: #{temporal_feature_aggregator.1} parent=19 // pred_fallthru
            _
          %210 = vnop
        $region20: #{temporal_feature_aggregator.1} parent=15 // pred_fallthru
          _
        // Predicated region
        $region40: #{temporal_feature_aggregator.1} parent=15 // pred_check
          %p211 = pneg %p70
        $region41: #{temporal_feature_aggregator.1} parent=15 // pred_check_branch
          %213 = sbr.rel (%p211) target = $region43
        $region42: #{temporal_feature_aggregator.1} parent=15 // pred_region
          %p214 = scmp.lt.s32.totalorder %s17, 1
          %s215 = scalar_select %p214, %s17, 1
          %s216 = smul.addr %s215, 96
          %s217 = smul.addr %s216, 4
          %s218 = scalar_lea.vmem %s1, %s217
        $region43: #{temporal_feature_aggregator.1} parent=15 // pred_fallthru
          _
        // Predicated region
        $region44: #{temporal_feature_aggregator.1} parent=15 // pred_check
          %p219 = pneg %p96
        $region45: #{temporal_feature_aggregator.1} parent=15 // pred_check_branch
          %221 = sbr.rel (%p219) target = $region47
        $region46: #{temporal_feature_aggregator.1} parent=15 // pred_region
          %p222 = scmp.lt.s32.totalorder %s17, 1
          %s223 = scalar_select %p222, %s17, 1
          %s224 = smul.addr %s223, 16
          %s225 = smul.addr %s224, 4
          %s226 = scalar_lea.vmem %s2, %s225
        $region47: #{temporal_feature_aggregator.1} parent=15 // pred_fallthru
          _
        // Predicated region
        $region48: #{temporal_feature_aggregator.1} parent=15 // pred_check
          %p227 = pneg %p122
        $region49: #{temporal_feature_aggregator.1} parent=15 // pred_check_branch
          %229 = sbr.rel (%p227) target = $region51
        $region50: #{temporal_feature_aggregator.1} parent=15 // pred_region
          %p230 = scmp.lt.s32.totalorder %s17, 1
          %s231 = scalar_select %p230, %s17, 1
          %s232 = smul.addr %s231, 48
          %s233 = smul.addr %s232, 4
          %s234 = scalar_lea.vmem %s3, %s233
        $region51: #{temporal_feature_aggregator.1} parent=15 // pred_fallthru
          _
      $region16: #{temporal_feature_aggregator.1} parent=5 // pred_fallthru
        _
      %p235 = scmp.le.s32.totalorder 1, %s10
      %p236 = scmp.lt.s32.totalorder %s10, 3
      %p237 = pnand %p235, %p236
      %p238 = pneg %p237
      // Predicated region
      $region52: #{temporal_feature_aggregator.1} parent=5 // pred_check
        _
      $region53: #{temporal_feature_aggregator.1} parent=5 // pred_check_branch
        %240 = sbr.rel (%p237) target = $region55
      $region54: #{temporal_feature_aggregator.1} parent=5 // pred_region
        %s241 = ssub.s32 %s10, 1
        %s242 = sand.u32 %s37, 1
        %s243 = sand.u32 %s37, 1
        %s244 = smul.addr %s243, 32
        %s245 = scalar_lea.vmem [#allocation2], %s244
        // Predicated region
        $region56: #{temporal_feature_aggregator.1} parent=54 // pred_check
          %p246 = pneg %p50
        $region57: #{temporal_feature_aggregator.1} parent=54 // pred_check_branch
          %248 = sbr.rel (%p246) target = $region59
        $region58: #{temporal_feature_aggregator.1} parent=54 // pred_region
          _
        $region59: #{temporal_feature_aggregator.1} parent=54 // pred_fallthru
          _
        %s249 = sand.u32 %s37, 1
        %s250 = sand.u32 %s37, 1
        %s251 = smul.addr %s250, 32
        %s252 = scalar_lea.vmem [#allocation2], %s251
        %p253 = pneg %p50
        %p254 = pneg %p47
        %p255 = scmp.lt.s32.totalorder %s19, 1
        %s256 = scalar_select %p255, %s19, 1
        %s257 = smul.addr %s256, 96
        %s258 = smul.addr %s257, 4
        %s259 = scalar_lea.vmem %s1, %s258
        %p260 = pneg %p76
        %p261 = pneg %p73
        %p262 = scmp.lt.s32.totalorder %s19, 1
        %s263 = scalar_select %p262, %s19, 1
        %s264 = smul.addr %s263, 16
        %s265 = smul.addr %s264, 4
        %s266 = scalar_lea.vmem %s2, %s265
        %p267 = pneg %p102
        %p268 = pneg %p99
        %p269 = scmp.lt.s32.totalorder %s19, 1
        %s270 = scalar_select %p269, %s19, 1
        %s271 = smul.addr %s270, 48
        %s272 = smul.addr %s271, 4
        %s273 = scalar_lea.vmem %s3, %s272
        %p274 = pneg %p128
        %p275 = pneg %p125
        %p276 = pneg %p156
        %p277 = pneg %p153
        %s278 = smul.u32 2, %s19
        %p279 = scmp.lt.s32.totalorder %s20, 0
        %s280 = scalar_select %p279, %s20, 0
        %p281 = scmp.lt.s32.totalorder %s278, 3
        %s282 = scalar_select %p281, %s278, 3
        %s283 = smul.addr %s280, 4
        %s284 = sadd.s32 %s282, %s283
        %s285 = smul.addr %s284, 2
        %s286 = scalar_lea.vmem %s4, %s285
        %s287 = smul.u32 2, %s20
        %s288 = smul.u32 2, %s19
        %p289 = scmp.lt.s32.totalorder %s19, 1
        %s290 = scalar_select %p289, %s19, 1
        %s291 = smul.addr %s290, 96
        %s292 = smul.addr %s291, 4
        %s293 = scalar_lea.vmem %s1, %s292
        %p294 = scmp.lt.s32.totalorder %s19, 1
        %s295 = scalar_select %p294, %s19, 1
        %s296 = smul.addr %s295, 16
        %s297 = smul.addr %s296, 4
        %s298 = scalar_lea.vmem %s2, %s297
        %p299 = scmp.lt.s32.totalorder %s19, 1
        %s300 = scalar_select %p299, %s19, 1
        %s301 = smul.addr %s300, 48
        %s302 = smul.addr %s301, 4
        %s303 = scalar_lea.vmem %s3, %s302
        %s304 = smul.u32 2, %s19
        %p305 = scmp.lt.s32.totalorder %s20, 0
        %s306 = scalar_select %p305, %s20, 0
        %p307 = scmp.lt.s32.totalorder %s304, 3
        %s308 = scalar_select %p307, %s304, 3
        %s309 = smul.addr %s306, 4
        %s310 = sadd.s32 %s308, %s309
        %s311 = smul.addr %s310, 2
        %s312 = scalar_lea.vmem %s4, %s311
        %s313 = smul.u32 2, %s19
        %v315 = vld [vmem:[%s245] sm:$0xff]
        %v316 = vld [vmem:[%s245 + $0x8] sm:$0xff]
        %v317 = vld [vmem:[%s245 + $0x10] sm:$0xff]
        %v318 = vld [vmem:[%s245 + $0x18] sm:$0xff]
        %v319 = vlaneseq
        %v320 = vshrl.u32 %v319, 7
        %v321 = vadd.s32 %v320, 8
        %vm322 = vcmp.lt.s32.totalorder %v320, 0
        %v323 = vsub.s32 0, %v320
        %v324 = vsel %vm322, %v323, %v320
        %v325 = vshrl.u32 %v324, 3
        %v326 = vand.u32 %v324, 7
        %v327 = vsub.s32 0, %v326
        %v328 = vsel %vm322, %v327, %v326
        %vm329 = vcmp.lt.s32.totalorder %v321, 0
        %v330 = vsub.s32 0, %v321
        %v331 = vsel %vm329, %v330, %v321
        %v332 = vshrl.u32 %v331, 3
        %v333 = vand.u32 %v331, 7
        %v334 = vsub.s32 0, %v333
        %v335 = vsel %vm329, %v334, %v333
        %vm336 = vcmp.ne.s32.totalorder %v328, 0
        %vm337 = vcmp.ne.s32.totalorder %v335, 0
        %vm338 = vcmp.lt.s32.totalorder %v328, 0
        %vm339 = vcmp.lt.s32.totalorder %v335, 0
        %vm340 = vmand %vm338, %vm336
        %vm341 = vmand %vm339, %vm337
        %v342 = vadd.s32 %v328, 8
        %v343 = vadd.s32 %v335, 8
        %v344 = vsel %vm340, %v342, %v328
        %v345 = vsel %vm341, %v343, %v335
        %vm346 = vcmp.lt.s32.totalorder %v344, 1
        %vm347 = vcmp.lt.s32.totalorder %v345, 1
        %vm348 = vcmp.lt.s32.totalorder %v344, 2
        %vm349 = vcmp.lt.s32.totalorder %v345, 2
        %vm350 = vcmp.ge.s32.totalorder %v344, 7
        %vm351 = vcmp.ge.s32.totalorder %v345, 7
        %vm352 = vcmp.ge.s32.totalorder %v344, 6
        %vm353 = vcmp.ge.s32.totalorder %v345, 6
        %v354 = vrot.slane %v315, 7
        %v355 = vrot.slane %v316, 7
        %v356 = vrot.slane %v317, 7
        %v357 = vrot.slane %v318, 7
        %vm358 = vcmp.lt.s32.totalorder %v320, 1
        %v359 = vsel %vm358, %v354, %v356
        %v360 = vsel %vm358, %v355, %v357
        %v361 = vsel %vm358, %v356, %v354
        %v362 = vsel %vm358, %v357, %v355
        %v363 = vrot.slane %v315, 1
        %v364 = vrot.slane %v316, 1
        %v365 = vrot.slane %v317, 1
        %v366 = vrot.slane %v318, 1
        %vm367 = vcmp.lt.s32.totalorder %v320, 7
        %v368 = vsel %vm367, %v363, %v365
        %v369 = vsel %vm367, %v364, %v366
        %v370 = vsel %vm367, %v365, %v363
        %v371 = vsel %vm367, %v366, %v364
        %v372 = vrot.slane %v315, 6
        %v373 = vrot.slane %v316, 6
        %v374 = vrot.slane %v317, 6
        %v375 = vrot.slane %v318, 6
        %vm376 = vcmp.lt.s32.totalorder %v320, 2
        %v377 = vsel %vm376, %v372, %v374
        %v378 = vsel %vm376, %v373, %v375
        %v379 = vsel %vm376, %v374, %v372
        %v380 = vsel %vm376, %v375, %v373
        %v381 = vrot.slane %v315, 2
        %v382 = vrot.slane %v316, 2
        %v383 = vrot.slane %v317, 2
        %v384 = vrot.slane %v318, 2
        %vm385 = vcmp.lt.s32.totalorder %v320, 6
        %v386 = vsel %vm385, %v381, %v383
        %v387 = vsel %vm385, %v382, %v384
        %v388 = vsel %vm385, %v383, %v381
        %v389 = vsel %vm385, %v384, %v382
        %v390 = vsel %vm346, 1, 0
        %v391 = vsel %vm347, 1, 0
        %vm392 = vcmp.eq.s32.totalorder %v390, 1
        %vm393 = vcmp.eq.s32.totalorder %v391, 1
        %v394 = vsel %vm392, 0.0, %v361
        %v395 = vsel %vm392, 0.0, %v362
        %v396 = vsel %vm393, 0.0, %v359
        %v397 = vsel %vm393, 0.0, %v360
        %v398 = vsel %vm350, 1, 0
        %v399 = vsel %vm351, 1, 0
        %vm400 = vcmp.eq.s32.totalorder %v398, 1
        %vm401 = vcmp.eq.s32.totalorder %v399, 1
        %v402 = vsel %vm400, 0.0, %v368
        %v403 = vsel %vm400, 0.0, %v369
        %v404 = vsel %vm401, 0.0, %v370
        %v405 = vsel %vm401, 0.0, %v371
        %v406 = vsel %vm348, 1, 0
        %v407 = vsel %vm349, 1, 0
        %vm408 = vcmp.eq.s32.totalorder %v406, 1
        %vm409 = vcmp.eq.s32.totalorder %v407, 1
        %v410 = vsel %vm408, 0.0, %v379
        %v411 = vsel %vm408, 0.0, %v380
        %v412 = vsel %vm409, 0.0, %v377
        %v413 = vsel %vm409, 0.0, %v378
        %v414 = vsel %vm352, 1, 0
        %v415 = vsel %vm353, 1, 0
        %vm416 = vcmp.eq.s32.totalorder %v414, 1
        %vm417 = vcmp.eq.s32.totalorder %v415, 1
        %v418 = vsel %vm416, 0.0, %v386
        %v419 = vsel %vm416, 0.0, %v387
        %v420 = vsel %vm417, 0.0, %v388
        %v421 = vsel %vm417, 0.0, %v389
        %v422 = vsel %vm392, -3.4028235e+38, %v361
        %v423 = vsel %vm392, -3.4028235e+38, %v362
        %v424 = vsel %vm393, -3.4028235e+38, %v359
        %v425 = vsel %vm393, -3.4028235e+38, %v360
        %v426 = vsel %vm400, -3.4028235e+38, %v368
        %v427 = vsel %vm400, -3.4028235e+38, %v369
        %v428 = vsel %vm401, -3.4028235e+38, %v370
        %v429 = vsel %vm401, -3.4028235e+38, %v371
        %v430 = vsel %vm408, -3.4028235e+38, %v379
        %v431 = vsel %vm408, -3.4028235e+38, %v380
        %v432 = vsel %vm409, -3.4028235e+38, %v377
        %v433 = vsel %vm409, -3.4028235e+38, %v378
        %v434 = vsel %vm416, -3.4028235e+38, %v386
        %v435 = vsel %vm416, -3.4028235e+38, %v387
        %v436 = vsel %vm417, -3.4028235e+38, %v388
        %v437 = vsel %vm417, -3.4028235e+38, %v389
        %v438 = vadd.f32 %v394, %v315
        %v439 = vadd.f32 %v395, %v316
        %v440 = vadd.f32 %v396, %v317
        %v441 = vadd.f32 %v397, %v318
        %v442 = vadd.f32 %v438, %v402
        %v443 = vadd.f32 %v439, %v403
        %v444 = vadd.f32 %v440, %v404
        %v445 = vadd.f32 %v441, %v405
        %v446 = vmul.f32 %v442, 0.33333334
        %v447 = vmul.f32 %v443, 0.33333334
        %v448 = vmul.f32 %v444, 0.33333334
        %v449 = vmul.f32 %v445, 0.33333334
        %v450 = vmax.f32 %v422, %v315
        %v451 = vmax.f32 %v423, %v316
        %v452 = vmax.f32 %v424, %v317
        %v453 = vmax.f32 %v425, %v318
        %v454 = vmax.f32 %v450, %v426
        %v455 = vmax.f32 %v451, %v427
        %v456 = vmax.f32 %v452, %v428
        %v457 = vmax.f32 %v453, %v429
        %v458 = vadd.f32 %v446, %v454
        %v459 = vadd.f32 %v447, %v455
        %v460 = vadd.f32 %v448, %v456
        %v461 = vadd.f32 %v449, %v457
        %v462 = vadd.f32 %v410, %v394
        %v463 = vadd.f32 %v411, %v395
        %v464 = vadd.f32 %v412, %v396
        %v465 = vadd.f32 %v413, %v397
        %v466 = vadd.f32 %v462, %v315
        %v467 = vadd.f32 %v463, %v316
        %v468 = vadd.f32 %v464, %v317
        %v469 = vadd.f32 %v465, %v318
        %v470 = vadd.f32 %v466, %v402
        %v471 = vadd.f32 %v467, %v403
        %v472 = vadd.f32 %v468, %v404
        %v473 = vadd.f32 %v469, %v405
        %v474 = vadd.f32 %v470, %v418
        %v475 = vadd.f32 %v471, %v419
        %v476 = vadd.f32 %v472, %v420
        %v477 = vadd.f32 %v473, %v421
        %v478 = vmul.f32 %v474, 0.2
        %v479 = vmul.f32 %v475, 0.2
        %v480 = vmul.f32 %v476, 0.2
        %v481 = vmul.f32 %v477, 0.2
        %v482 = vmax.f32 %v430, %v422
        %v483 = vmax.f32 %v431, %v423
        %v484 = vmax.f32 %v432, %v424
        %v485 = vmax.f32 %v433, %v425
        %v486 = vmax.f32 %v426, %v434
        %v487 = vmax.f32 %v427, %v435
        %v488 = vmax.f32 %v428, %v436
        %v489 = vmax.f32 %v429, %v437
        %v490 = vmax.f32 %v482, %v486
        %v491 = vmax.f32 %v483, %v487
        %v492 = vmax.f32 %v484, %v488
        %v493 = vmax.f32 %v485, %v489
        %v494 = vmax.f32 %v490, %v315
        %v495 = vmax.f32 %v491, %v316
        %v496 = vmax.f32 %v492, %v317
        %v497 = vmax.f32 %v493, %v318
        %v498 = vadd.f32 %v478, %v494
        %v499 = vadd.f32 %v479, %v495
        %v500 = vadd.f32 %v480, %v496
        %v501 = vadd.f32 %v481, %v497
        %v502 = vpack.c.bf16 %v396, %v394
        %v503 = vpack.c.bf16 %v397, %v395
        %v504 = vld [vmem:[%s293] sm:$0xf]
        %v505 = vld [vmem:[%s293 + $0x4] sm:$0xf]
        %v506 = vld [vmem:[%s293 + $0x8] sm:$0xf]
        %v507 = vld [vmem:[%s293 + $0xc] sm:$0xf]
        %v508 = vld [vmem:[%s293 + $0x10] sm:$0xf]
        %v509 = vld [vmem:[%s293 + $0x14] sm:$0xf]
        %v510 = vld [vmem:[%s293 + $0x18] sm:$0xf]
        %v511 = vld [vmem:[%s293 + $0x1c] sm:$0xf]
        %v512 = vld [vmem:[%s293 + $0x20] sm:$0xf]
        %v513 = vld [vmem:[%s293 + $0x24] sm:$0xf]
        %v514 = vld [vmem:[%s293 + $0x28] sm:$0xf]
        %v515 = vld [vmem:[%s293 + $0x2c] sm:$0xf]
        %v516 = vld [vmem:[%s293 + $0x30] sm:$0xf]
        %v517 = vld [vmem:[%s293 + $0x34] sm:$0xf]
        %v518 = vld [vmem:[%s293 + $0x38] sm:$0xf]
        %v519 = vld [vmem:[%s293 + $0x3c] sm:$0xf]
        %v520 = vld [vmem:[%s293 + $0x40] sm:$0xf]
        %v521 = vld [vmem:[%s293 + $0x44] sm:$0xf]
        %v522 = vld [vmem:[%s293 + $0x48] sm:$0xf]
        %v523 = vld [vmem:[%s293 + $0x4c] sm:$0xf]
        %v524 = vld [vmem:[%s293 + $0x50] sm:$0xf]
        %v525 = vld [vmem:[%s293 + $0x54] sm:$0xf]
        %v526 = vld [vmem:[%s293 + $0x58] sm:$0xf]
        %v527 = vld [vmem:[%s293 + $0x5c] sm:$0xf]
        %v528 = vld [vmem:[%s293 + $0x60] sm:$0xf]
        %v529 = vld [vmem:[%s293 + $0x64] sm:$0xf]
        %v530 = vld [vmem:[%s293 + $0x68] sm:$0xf]
        %v531 = vld [vmem:[%s293 + $0x6c] sm:$0xf]
        %v532 = vld [vmem:[%s293 + $0x70] sm:$0xf]
        %v533 = vld [vmem:[%s293 + $0x74] sm:$0xf]
        %v534 = vld [vmem:[%s293 + $0x78] sm:$0xf]
        %v535 = vld [vmem:[%s293 + $0x7c] sm:$0xf]
        %v536 = vpack.c.bf16 %v317, %v315
        %v537 = vpack.c.bf16 %v318, %v316
        %s538 = scalar_lea.vmem %s293, 128
        %v539 = vld [vmem:[%s538] sm:$0xf]
        %v540 = vld [vmem:[%s538 + $0x4] sm:$0xf]
        %v541 = vld [vmem:[%s538 + $0x8] sm:$0xf]
        %v542 = vld [vmem:[%s538 + $0xc] sm:$0xf]
        %v543 = vld [vmem:[%s538 + $0x10] sm:$0xf]
        %v544 = vld [vmem:[%s538 + $0x14] sm:$0xf]
        %v545 = vld [vmem:[%s538 + $0x18] sm:$0xf]
        %v546 = vld [vmem:[%s538 + $0x1c] sm:$0xf]
        %v547 = vld [vmem:[%s538 + $0x20] sm:$0xf]
        %v548 = vld [vmem:[%s538 + $0x24] sm:$0xf]
        %v549 = vld [vmem:[%s538 + $0x28] sm:$0xf]
        %v550 = vld [vmem:[%s538 + $0x2c] sm:$0xf]
        %v551 = vld [vmem:[%s538 + $0x30] sm:$0xf]
        %v552 = vld [vmem:[%s538 + $0x34] sm:$0xf]
        %v553 = vld [vmem:[%s538 + $0x38] sm:$0xf]
        %v554 = vld [vmem:[%s538 + $0x3c] sm:$0xf]
        %v555 = vld [vmem:[%s538 + $0x40] sm:$0xf]
        %v556 = vld [vmem:[%s538 + $0x44] sm:$0xf]
        %v557 = vld [vmem:[%s538 + $0x48] sm:$0xf]
        %v558 = vld [vmem:[%s538 + $0x4c] sm:$0xf]
        %v559 = vld [vmem:[%s538 + $0x50] sm:$0xf]
        %v560 = vld [vmem:[%s538 + $0x54] sm:$0xf]
        %v561 = vld [vmem:[%s538 + $0x58] sm:$0xf]
        %v562 = vld [vmem:[%s538 + $0x5c] sm:$0xf]
        %v563 = vld [vmem:[%s538 + $0x60] sm:$0xf]
        %v564 = vld [vmem:[%s538 + $0x64] sm:$0xf]
        %v565 = vld [vmem:[%s538 + $0x68] sm:$0xf]
        %v566 = vld [vmem:[%s538 + $0x6c] sm:$0xf]
        %v567 = vld [vmem:[%s538 + $0x70] sm:$0xf]
        %v568 = vld [vmem:[%s538 + $0x74] sm:$0xf]
        %v569 = vld [vmem:[%s538 + $0x78] sm:$0xf]
        %v570 = vld [vmem:[%s538 + $0x7c] sm:$0xf]
        %v603 = vunpack.c.l.b16 %v539
        %v604 = vunpack.c.l.b16 %v540
        %v605 = vunpack.c.l.b16 %v541
        %v606 = vunpack.c.l.b16 %v542
        %v607 = vunpack.c.l.b16 %v543
        %v608 = vunpack.c.l.b16 %v544
        %v609 = vunpack.c.l.b16 %v545
        %v610 = vunpack.c.l.b16 %v546
        %v611 = vunpack.c.l.b16 %v547
        %v612 = vunpack.c.l.b16 %v548
        %v613 = vunpack.c.l.b16 %v549
        %v614 = vunpack.c.l.b16 %v550
        %v615 = vunpack.c.l.b16 %v551
        %v616 = vunpack.c.l.b16 %v552
        %v617 = vunpack.c.l.b16 %v553
        %v618 = vunpack.c.l.b16 %v554
        %v619 = vunpack.c.l.b16 %v555
        %v620 = vunpack.c.l.b16 %v556
        %v621 = vunpack.c.l.b16 %v557
        %v622 = vunpack.c.l.b16 %v558
        %v623 = vunpack.c.l.b16 %v559
        %v624 = vunpack.c.l.b16 %v560
        %v625 = vunpack.c.l.b16 %v561
        %v626 = vunpack.c.l.b16 %v562
        %v627 = vunpack.c.l.b16 %v563
        %v628 = vunpack.c.l.b16 %v564
        %v629 = vunpack.c.l.b16 %v565
        %v630 = vunpack.c.l.b16 %v566
        %v631 = vunpack.c.l.b16 %v567
        %v632 = vunpack.c.l.b16 %v568
        %v633 = vunpack.c.l.b16 %v569
        %v634 = vunpack.c.l.b16 %v570
        %v635 = vpack.c.b16 %v604, %v603
        %v636 = vpack.c.b16 %v606, %v605
        %v637 = vpack.c.b16 %v608, %v607
        %v638 = vpack.c.b16 %v610, %v609
        %v639 = vpack.c.b16 %v612, %v611
        %v640 = vpack.c.b16 %v614, %v613
        %v641 = vpack.c.b16 %v616, %v615
        %v642 = vpack.c.b16 %v618, %v617
        %v643 = vpack.c.b16 %v620, %v619
        %v644 = vpack.c.b16 %v622, %v621
        %v645 = vpack.c.b16 %v624, %v623
        %v646 = vpack.c.b16 %v626, %v625
        %v647 = vpack.c.b16 %v628, %v627
        %v648 = vpack.c.b16 %v630, %v629
        %v649 = vpack.c.b16 %v632, %v631
        %v650 = vpack.c.b16 %v634, %v633
        %667 = vmatpush.bf16.msra.mxu0 %v642
        %668 = vmatpush.bf16.msra.mxu0 %v641
        %669 = vmatpush.bf16.msra.mxu0 %v640
        %670 = vmatpush.bf16.msra.mxu0 %v639
        %671 = vmatpush.bf16.msra.mxu0 %v638
        %672 = vmatpush.bf16.msra.mxu0 %v637
        %673 = vmatpush.bf16.msra.mxu0 %v636
        %674 = vmatpush.bf16.msra.mxu0 %v635
        %675 = vmatmul.bf16.gmra.mxu0 %v536
        %v676 = vpop.f32.mrf.mxu0
        %v677 = vadd.f32 0.0, %v676
        %v678 = vpop.f32.mrf.mxu0
        %v679 = vadd.f32 0.0, %v678
        %680 = vdwg.mxu0
        %681 = vmatpush.bf16.msra.mxu0 %v650
        %682 = vmatpush.bf16.msra.mxu0 %v649
        %683 = vmatpush.bf16.msra.mxu0 %v648
        %684 = vmatpush.bf16.msra.mxu0 %v647
        %685 = vmatpush.bf16.msra.mxu0 %v646
        %686 = vmatpush.bf16.msra.mxu0 %v645
        %687 = vmatpush.bf16.msra.mxu0 %v644
        %688 = vmatpush.bf16.msra.mxu0 %v643
        %689 = vmatmul.bf16.gmra.mxu0 %v537
        %v690 = vpop.f32.mrf.mxu0
        %v691 = vadd.f32 %v677, %v690
        %v692 = vpop.f32.mrf.mxu0
        %v693 = vadd.f32 %v679, %v692
        %694 = vdwg.mxu0
        %v727 = vunpack.c.l.b16 %v504
        %v728 = vunpack.c.l.b16 %v505
        %v729 = vunpack.c.l.b16 %v506
        %v730 = vunpack.c.l.b16 %v507
        %v731 = vunpack.c.l.b16 %v508
        %v732 = vunpack.c.l.b16 %v509
        %v733 = vunpack.c.l.b16 %v510
        %v734 = vunpack.c.l.b16 %v511
        %v735 = vunpack.c.l.b16 %v512
        %v736 = vunpack.c.l.b16 %v513
        %v737 = vunpack.c.l.b16 %v514
        %v738 = vunpack.c.l.b16 %v515
        %v739 = vunpack.c.l.b16 %v516
        %v740 = vunpack.c.l.b16 %v517
        %v741 = vunpack.c.l.b16 %v518
        %v742 = vunpack.c.l.b16 %v519
        %v743 = vunpack.c.l.b16 %v520
        %v744 = vunpack.c.l.b16 %v521
        %v745 = vunpack.c.l.b16 %v522
        %v746 = vunpack.c.l.b16 %v523
        %v747 = vunpack.c.l.b16 %v524
        %v748 = vunpack.c.l.b16 %v525
        %v749 = vunpack.c.l.b16 %v526
        %v750 = vunpack.c.l.b16 %v527
        %v751 = vunpack.c.l.b16 %v528
        %v752 = vunpack.c.l.b16 %v529
        %v753 = vunpack.c.l.b16 %v530
        %v754 = vunpack.c.l.b16 %v531
        %v755 = vunpack.c.l.b16 %v532
        %v756 = vunpack.c.l.b16 %v533
        %v757 = vunpack.c.l.b16 %v534
        %v758 = vunpack.c.l.b16 %v535
        %v759 = vpack.c.b16 %v728, %v727
        %v760 = vpack.c.b16 %v730, %v729
        %v761 = vpack.c.b16 %v732, %v731
        %v762 = vpack.c.b16 %v734, %v733
        %v763 = vpack.c.b16 %v736, %v735
        %v764 = vpack.c.b16 %v738, %v737
        %v765 = vpack.c.b16 %v740, %v739
        %v766 = vpack.c.b16 %v742, %v741
        %v767 = vpack.c.b16 %v744, %v743
        %v768 = vpack.c.b16 %v746, %v745
        %v769 = vpack.c.b16 %v748, %v747
        %v770 = vpack.c.b16 %v750, %v749
        %v771 = vpack.c.b16 %v752, %v751
        %v772 = vpack.c.b16 %v754, %v753
        %v773 = vpack.c.b16 %v756, %v755
        %v774 = vpack.c.b16 %v758, %v757
        %791 = vmatpush.bf16.msra.mxu0 %v766
        %792 = vmatpush.bf16.msra.mxu0 %v765
        %793 = vmatpush.bf16.msra.mxu0 %v764
        %794 = vmatpush.bf16.msra.mxu0 %v763
        %795 = vmatpush.bf16.msra.mxu0 %v762
        %796 = vmatpush.bf16.msra.mxu0 %v761
        %797 = vmatpush.bf16.msra.mxu0 %v760
        %798 = vmatpush.bf16.msra.mxu0 %v759
        %799 = vmatmul.bf16.gmra.mxu0 %v502
        %v800 = vpop.f32.mrf.mxu0
        %v801 = vadd.f32 %v691, %v800
        %v802 = vpop.f32.mrf.mxu0
        %v803 = vadd.f32 %v693, %v802
        %804 = vdwg.mxu0
        %805 = vmatpush.bf16.msra.mxu0 %v774
        %806 = vmatpush.bf16.msra.mxu0 %v773
        %807 = vmatpush.bf16.msra.mxu0 %v772
        %808 = vmatpush.bf16.msra.mxu0 %v771
        %809 = vmatpush.bf16.msra.mxu0 %v770
        %810 = vmatpush.bf16.msra.mxu0 %v769
        %811 = vmatpush.bf16.msra.mxu0 %v768
        %812 = vmatpush.bf16.msra.mxu0 %v767
        %813 = vmatmul.bf16.gmra.mxu0 %v503
        %v814 = vpop.f32.mrf.mxu0
        %v815 = vadd.f32 %v801, %v814
        %v816 = vpop.f32.mrf.mxu0
        %v817 = vadd.f32 %v803, %v816
        %818 = vdwg.mxu0
        %v819 = vpack.c.bf16 %v404, %v402
        %v820 = vpack.c.bf16 %v405, %v403
        %s821 = scalar_lea.vmem %s293, 256
        %v822 = vld [vmem:[%s821] sm:$0xf]
        %v823 = vld [vmem:[%s821 + $0x4] sm:$0xf]
        %v824 = vld [vmem:[%s821 + $0x8] sm:$0xf]
        %v825 = vld [vmem:[%s821 + $0xc] sm:$0xf]
        %v826 = vld [vmem:[%s821 + $0x10] sm:$0xf]
        %v827 = vld [vmem:[%s821 + $0x14] sm:$0xf]
        %v828 = vld [vmem:[%s821 + $0x18] sm:$0xf]
        %v829 = vld [vmem:[%s821 + $0x1c] sm:$0xf]
        %v830 = vld [vmem:[%s821 + $0x20] sm:$0xf]
        %v831 = vld [vmem:[%s821 + $0x24] sm:$0xf]
        %v832 = vld [vmem:[%s821 + $0x28] sm:$0xf]
        %v833 = vld [vmem:[%s821 + $0x2c] sm:$0xf]
        %v834 = vld [vmem:[%s821 + $0x30] sm:$0xf]
        %v835 = vld [vmem:[%s821 + $0x34] sm:$0xf]
        %v836 = vld [vmem:[%s821 + $0x38] sm:$0xf]
        %v837 = vld [vmem:[%s821 + $0x3c] sm:$0xf]
        %v838 = vld [vmem:[%s821 + $0x40] sm:$0xf]
        %v839 = vld [vmem:[%s821 + $0x44] sm:$0xf]
        %v840 = vld [vmem:[%s821 + $0x48] sm:$0xf]
        %v841 = vld [vmem:[%s821 + $0x4c] sm:$0xf]
        %v842 = vld [vmem:[%s821 + $0x50] sm:$0xf]
        %v843 = vld [vmem:[%s821 + $0x54] sm:$0xf]
        %v844 = vld [vmem:[%s821 + $0x58] sm:$0xf]
        %v845 = vld [vmem:[%s821 + $0x5c] sm:$0xf]
        %v846 = vld [vmem:[%s821 + $0x60] sm:$0xf]
        %v847 = vld [vmem:[%s821 + $0x64] sm:$0xf]
        %v848 = vld [vmem:[%s821 + $0x68] sm:$0xf]
        %v849 = vld [vmem:[%s821 + $0x6c] sm:$0xf]
        %v850 = vld [vmem:[%s821 + $0x70] sm:$0xf]
        %v851 = vld [vmem:[%s821 + $0x74] sm:$0xf]
        %v852 = vld [vmem:[%s821 + $0x78] sm:$0xf]
        %v853 = vld [vmem:[%s821 + $0x7c] sm:$0xf]
        %v886 = vunpack.c.l.b16 %v822
        %v887 = vunpack.c.l.b16 %v823
        %v888 = vunpack.c.l.b16 %v824
        %v889 = vunpack.c.l.b16 %v825
        %v890 = vunpack.c.l.b16 %v826
        %v891 = vunpack.c.l.b16 %v827
        %v892 = vunpack.c.l.b16 %v828
        %v893 = vunpack.c.l.b16 %v829
        %v894 = vunpack.c.l.b16 %v830
        %v895 = vunpack.c.l.b16 %v831
        %v896 = vunpack.c.l.b16 %v832
        %v897 = vunpack.c.l.b16 %v833
        %v898 = vunpack.c.l.b16 %v834
        %v899 = vunpack.c.l.b16 %v835
        %v900 = vunpack.c.l.b16 %v836
        %v901 = vunpack.c.l.b16 %v837
        %v902 = vunpack.c.l.b16 %v838
        %v903 = vunpack.c.l.b16 %v839
        %v904 = vunpack.c.l.b16 %v840
        %v905 = vunpack.c.l.b16 %v841
        %v906 = vunpack.c.l.b16 %v842
        %v907 = vunpack.c.l.b16 %v843
        %v908 = vunpack.c.l.b16 %v844
        %v909 = vunpack.c.l.b16 %v845
        %v910 = vunpack.c.l.b16 %v846
        %v911 = vunpack.c.l.b16 %v847
        %v912 = vunpack.c.l.b16 %v848
        %v913 = vunpack.c.l.b16 %v849
        %v914 = vunpack.c.l.b16 %v850
        %v915 = vunpack.c.l.b16 %v851
        %v916 = vunpack.c.l.b16 %v852
        %v917 = vunpack.c.l.b16 %v853
        %v918 = vpack.c.b16 %v887, %v886
        %v919 = vpack.c.b16 %v889, %v888
        %v920 = vpack.c.b16 %v891, %v890
        %v921 = vpack.c.b16 %v893, %v892
        %v922 = vpack.c.b16 %v895, %v894
        %v923 = vpack.c.b16 %v897, %v896
        %v924 = vpack.c.b16 %v899, %v898
        %v925 = vpack.c.b16 %v901, %v900
        %v926 = vpack.c.b16 %v903, %v902
        %v927 = vpack.c.b16 %v905, %v904
        %v928 = vpack.c.b16 %v907, %v906
        %v929 = vpack.c.b16 %v909, %v908
        %v930 = vpack.c.b16 %v911, %v910
        %v931 = vpack.c.b16 %v913, %v912
        %v932 = vpack.c.b16 %v915, %v914
        %v933 = vpack.c.b16 %v917, %v916
        %950 = vmatpush.bf16.msra.mxu0 %v925
        %951 = vmatpush.bf16.msra.mxu0 %v924
        %952 = vmatpush.bf16.msra.mxu0 %v923
        %953 = vmatpush.bf16.msra.mxu0 %v922
        %954 = vmatpush.bf16.msra.mxu0 %v921
        %955 = vmatpush.bf16.msra.mxu0 %v920
        %956 = vmatpush.bf16.msra.mxu0 %v919
        %957 = vmatpush.bf16.msra.mxu0 %v918
        %958 = vmatmul.bf16.gmra.mxu0 %v819
        %v959 = vpop.f32.mrf.mxu0
        %v960 = vadd.f32 0.0, %v959
        %v961 = vpop.f32.mrf.mxu0
        %v962 = vadd.f32 0.0, %v961
        %963 = vdwg.mxu0
        %964 = vmatpush.bf16.msra.mxu0 %v933
        %965 = vmatpush.bf16.msra.mxu0 %v932
        %966 = vmatpush.bf16.msra.mxu0 %v931
        %967 = vmatpush.bf16.msra.mxu0 %v930
        %968 = vmatpush.bf16.msra.mxu0 %v929
        %969 = vmatpush.bf16.msra.mxu0 %v928
        %970 = vmatpush.bf16.msra.mxu0 %v927
        %971 = vmatpush.bf16.msra.mxu0 %v926
        %972 = vmatmul.bf16.gmra.mxu0 %v820
        %v973 = vpop.f32.mrf.mxu0
        %v974 = vadd.f32 %v960, %v973
        %v975 = vpop.f32.mrf.mxu0
        %v976 = vadd.f32 %v962, %v975
        %977 = vdwg.mxu0
        %v978 = vadd.f32 %v815, %v974
        %v979 = vadd.f32 %v817, %v976
        %vm980 = vcmp.ge.f32.partialorder %v978, 0.0
        %vm981 = vcmp.ge.f32.partialorder %v979, 0.0
        %v982 = vmul.f32 %v978, 0.01
        %v983 = vmul.f32 %v979, 0.01
        %v984 = vsel %vm980, %v978, %v982
        %v985 = vsel %vm981, %v979, %v983
        %v986 = vpack.c.bf16 %v985, %v984
        %v987 = vld [vmem:[%s298] sm:$0xff]
        %v988 = vld [vmem:[%s298 + $0x8] sm:$0xff]
        %v989 = vld [vmem:[%s298 + $0x10] sm:$0xff]
        %v990 = vld [vmem:[%s298 + $0x18] sm:$0xff]
        %v991 = vld [vmem:[%s298 + $0x20] sm:$0xff]
        %v992 = vld [vmem:[%s298 + $0x28] sm:$0xff]
        %v993 = vld [vmem:[%s298 + $0x30] sm:$0xff]
        %v994 = vld [vmem:[%s298 + $0x38] sm:$0xff]
        %v1003 = vunpack.c.l.b16 %v987
        %v1004 = vunpack.c.h.b16 %v987
        %v1005 = vunpack.c.l.b16 %v988
        %v1006 = vunpack.c.h.b16 %v988
        %v1007 = vunpack.c.l.b16 %v989
        %v1008 = vunpack.c.h.b16 %v989
        %v1009 = vunpack.c.l.b16 %v990
        %v1010 = vunpack.c.h.b16 %v990
        %v1011 = vunpack.c.l.b16 %v991
        %v1012 = vunpack.c.h.b16 %v991
        %v1013 = vunpack.c.l.b16 %v992
        %v1014 = vunpack.c.h.b16 %v992
        %v1015 = vunpack.c.l.b16 %v993
        %v1016 = vunpack.c.h.b16 %v993
        %v1017 = vunpack.c.l.b16 %v994
        %v1018 = vunpack.c.h.b16 %v994
        %v1019 = vpack.c.b16 %v1005, %v1003
        %v1020 = vpack.c.b16 %v1006, %v1004
        %v1021 = vpack.c.b16 %v1009, %v1007
        %v1022 = vpack.c.b16 %v1010, %v1008
        %v1023 = vpack.c.b16 %v1013, %v1011
        %v1024 = vpack.c.b16 %v1014, %v1012
        %v1025 = vpack.c.b16 %v1017, %v1015
        %v1026 = vpack.c.b16 %v1018, %v1016
        %vm1035 = vcmask 523264
        %v1037 = vsel %vm1035, %v986, 0
        %1039 = vmatpush.bf16.msra.mxu0 0
        %1040 = vmatpush.bf16.msra.mxu0 0
        %1041 = vmatpush.bf16.msra.mxu0 0
        %1042 = vmatpush.bf16.msra.mxu0 0
        %1043 = vmatpush.bf16.msra.mxu0 %v1025
        %1044 = vmatpush.bf16.msra.mxu0 %v1023
        %1045 = vmatpush.bf16.msra.mxu0 %v1021
        %1046 = vmatpush.bf16.msra.mxu0 %v1019
        %1047 = vmatmul.bf16.gmra.mxu0 %v1037
        %v1048 = vpop.f32.mrf.mxu0
        %v1049 = vadd.f32 0.0, %v1048
        %v1050 = vpop.f32.mrf.mxu0
        %v1051 = vadd.f32 0.0, %v1050
        %1052 = vdwg.mxu0
        %1053 = vmatpush.bf16.msra.mxu0 0
        %1054 = vmatpush.bf16.msra.mxu0 0
        %1055 = vmatpush.bf16.msra.mxu0 0
        %1056 = vmatpush.bf16.msra.mxu0 0
        %1057 = vmatpush.bf16.msra.mxu0 %v1026
        %1058 = vmatpush.bf16.msra.mxu0 %v1024
        %1059 = vmatpush.bf16.msra.mxu0 %v1022
        %1060 = vmatpush.bf16.msra.mxu0 %v1020
        %1061 = vmatmul.bf16.gmra.mxu0 %v1037
        %v1062 = vpop.f32.mrf.mxu0
        %v1063 = vadd.f32 0.0, %v1062
        %v1064 = vpop.f32.mrf.mxu0
        %v1065 = vadd.f32 0.0, %v1064
        %1066 = vdwg.mxu0
        %1069 = vrot.lane.b32.xlu0 %v984, 64
        %v1070 = vpop.permute.xlu0 %1069
        %1071 = vrot.lane.b32.xlu0 %v985, 64
        %v1072 = vpop.permute.xlu0 %1071
        %v1075 = vrot.slane %v1070, 7
        %v1076 = vrot.slane %v1072, 7
        %v1077 = vsel %vm358, %v1075, %v1076
        %v1078 = vsel %vm358, %v1076, %v1075
        %v1079 = vsel %vm392, 0.0, %v1078
        %v1080 = vsel %vm393, 0.0, %v1077
        %v1081 = vrot.slane %v1070, 1
        %v1082 = vrot.slane %v1072, 1
        %v1083 = vsel %vm367, %v1081, %v1082
        %v1084 = vsel %vm367, %v1082, %v1081
        %v1085 = vsel %vm400, 0.0, %v1083
        %v1086 = vsel %vm401, 0.0, %v1084
        %v1087 = vpack.c.bf16 %v1079, %v1079
        %v1088 = vpack.c.bf16 %v1080, %v1080
        %v1089 = vpack.c.bf16 %v984, %v984
        %v1090 = vpack.c.bf16 %v985, %v985
        %v1091 = vpack.c.bf16 %v1085, %v1085
        %v1092 = vpack.c.bf16 %v1086, %v1086
        %v1095 = vunpack.c.l.b16 %v1087
        %v1096 = vunpack.c.l.b16 %v1088
        %v1097 = vpack.c.b16 %v1096, %v1095
        %v1100 = vunpack.c.l.b16 %v1089
        %v1101 = vunpack.c.l.b16 %v1090
        %v1102 = vpack.c.b16 %v1101, %v1100
        %v1105 = vunpack.c.l.b16 %v1091
        %v1106 = vunpack.c.l.b16 %v1092
        %v1107 = vpack.c.b16 %v1106, %v1105
        %v1110 = vsel %vm1035, %v1097, %v1102
        %v1112 = vld [vmem:[%s303] sm:$0xff]
        %v1113 = vld [vmem:[%s303 + $0x8] sm:$0xff]
        %v1114 = vld [vmem:[%s303 + $0x10] sm:$0xff]
        %v1115 = vld [vmem:[%s303 + $0x18] sm:$0xff]
        %v1116 = vld [vmem:[%s303 + $0x20] sm:$0xff]
        %v1117 = vld [vmem:[%s303 + $0x28] sm:$0xff]
        %v1118 = vld [vmem:[%s303 + $0x30] sm:$0xff]
        %v1119 = vld [vmem:[%s303 + $0x38] sm:$0xff]
        %v1120 = vld [vmem:[%s303 + $0x40] sm:$0xff]
        %v1121 = vld [vmem:[%s303 + $0x48] sm:$0xff]
        %v1122 = vld [vmem:[%s303 + $0x50] sm:$0xff]
        %v1123 = vld [vmem:[%s303 + $0x58] sm:$0xff]
        %v1124 = vld [vmem:[%s303 + $0x60] sm:$0xff]
        %v1125 = vld [vmem:[%s303 + $0x68] sm:$0xff]
        %v1126 = vld [vmem:[%s303 + $0x70] sm:$0xff]
        %v1127 = vld [vmem:[%s303 + $0x78] sm:$0xff]
        %v1128 = vld [vmem:[%s303 + $0x80] sm:$0xff]
        %v1129 = vld [vmem:[%s303 + $0x88] sm:$0xff]
        %v1130 = vld [vmem:[%s303 + $0x90] sm:$0xff]
        %v1131 = vld [vmem:[%s303 + $0x98] sm:$0xff]
        %v1132 = vld [vmem:[%s303 + $0xa0] sm:$0xff]
        %v1133 = vld [vmem:[%s303 + $0xa8] sm:$0xff]
        %v1134 = vld [vmem:[%s303 + $0xb0] sm:$0xff]
        %v1135 = vld [vmem:[%s303 + $0xb8] sm:$0xff]
        %v1160 = vunpack.c.l.b16 %v1112
        %v1161 = vunpack.c.h.b16 %v1112
        %v1162 = vunpack.c.l.b16 %v1113
        %v1163 = vunpack.c.h.b16 %v1113
        %v1164 = vunpack.c.l.b16 %v1114
        %v1165 = vunpack.c.h.b16 %v1114
        %v1166 = vunpack.c.l.b16 %v1115
        %v1167 = vunpack.c.h.b16 %v1115
        %v1168 = vunpack.c.l.b16 %v1116
        %v1169 = vunpack.c.h.b16 %v1116
        %v1170 = vunpack.c.l.b16 %v1117
        %v1171 = vunpack.c.h.b16 %v1117
        %v1172 = vunpack.c.l.b16 %v1118
        %v1173 = vunpack.c.h.b16 %v1118
        %v1174 = vunpack.c.l.b16 %v1119
        %v1175 = vunpack.c.h.b16 %v1119
        %v1176 = vunpack.c.l.b16 %v1120
        %v1177 = vunpack.c.h.b16 %v1120
        %v1178 = vunpack.c.l.b16 %v1121
        %v1179 = vunpack.c.h.b16 %v1121
        %v1180 = vunpack.c.l.b16 %v1122
        %v1181 = vunpack.c.h.b16 %v1122
        %v1182 = vunpack.c.l.b16 %v1123
        %v1183 = vunpack.c.h.b16 %v1123
        %v1184 = vunpack.c.l.b16 %v1124
        %v1185 = vunpack.c.h.b16 %v1124
        %v1186 = vunpack.c.l.b16 %v1125
        %v1187 = vunpack.c.h.b16 %v1125
        %v1188 = vunpack.c.l.b16 %v1126
        %v1189 = vunpack.c.h.b16 %v1126
        %v1190 = vunpack.c.l.b16 %v1127
        %v1191 = vunpack.c.h.b16 %v1127
        %v1192 = vunpack.c.l.b16 %v1128
        %v1193 = vunpack.c.h.b16 %v1128
        %v1194 = vunpack.c.l.b16 %v1129
        %v1195 = vunpack.c.h.b16 %v1129
        %v1196 = vunpack.c.l.b16 %v1130
        %v1197 = vunpack.c.h.b16 %v1130
        %v1198 = vunpack.c.l.b16 %v1131
        %v1199 = vunpack.c.h.b16 %v1131
        %v1200 = vunpack.c.l.b16 %v1132
        %v1201 = vunpack.c.h.b16 %v1132
        %v1202 = vunpack.c.l.b16 %v1133
        %v1203 = vunpack.c.h.b16 %v1133
        %v1204 = vunpack.c.l.b16 %v1134
        %v1205 = vunpack.c.h.b16 %v1134
        %v1206 = vunpack.c.l.b16 %v1135
        %v1207 = vunpack.c.h.b16 %v1135
        %v1208 = vpack.c.b16 %v1162, %v1160
        %v1209 = vpack.c.b16 %v1163, %v1161
        %v1210 = vpack.c.b16 %v1166, %v1164
        %v1211 = vpack.c.b16 %v1167, %v1165
        %v1212 = vpack.c.b16 %v1170, %v1168
        %v1213 = vpack.c.b16 %v1171, %v1169
        %v1214 = vpack.c.b16 %v1174, %v1172
        %v1215 = vpack.c.b16 %v1175, %v1173
        %v1216 = vpack.c.b16 %v1178, %v1176
        %v1217 = vpack.c.b16 %v1179, %v1177
        %v1218 = vpack.c.b16 %v1182, %v1180
        %v1219 = vpack.c.b16 %v1183, %v1181
        %v1220 = vpack.c.b16 %v1186, %v1184
        %v1221 = vpack.c.b16 %v1187, %v1185
        %v1222 = vpack.c.b16 %v1190, %v1188
        %v1223 = vpack.c.b16 %v1191, %v1189
        %v1224 = vpack.c.b16 %v1194, %v1192
        %v1225 = vpack.c.b16 %v1195, %v1193
        %v1226 = vpack.c.b16 %v1198, %v1196
        %v1227 = vpack.c.b16 %v1199, %v1197
        %v1228 = vpack.c.b16 %v1202, %v1200
        %v1229 = vpack.c.b16 %v1203, %v1201
        %v1230 = vpack.c.b16 %v1206, %v1204
        %v1231 = vpack.c.b16 %v1207, %v1205
        %v1257 = vsel %vm1035, %v1107, 0
        %1259 = vmatpush.bf16.msra.mxu0 %v1222
        %1260 = vmatpush.bf16.msra.mxu0 %v1220
        %1261 = vmatpush.bf16.msra.mxu0 %v1218
        %1262 = vmatpush.bf16.msra.mxu0 %v1216
        %1263 = vmatpush.bf16.msra.mxu0 %v1214
        %1264 = vmatpush.bf16.msra.mxu0 %v1212
        %1265 = vmatpush.bf16.msra.mxu0 %v1210
        %1266 = vmatpush.bf16.msra.mxu0 %v1208
        %1267 = vmatmul.bf16.gmra.mxu0 %v1110
        %v1268 = vpop.f32.mrf.mxu0
        %v1269 = vadd.f32 0.0, %v1268
        %v1270 = vpop.f32.mrf.mxu0
        %v1271 = vadd.f32 0.0, %v1270
        %1272 = vdwg.mxu0
        %1273 = vmatpush.bf16.msra.mxu0 0
        %1274 = vmatpush.bf16.msra.mxu0 0
        %1275 = vmatpush.bf16.msra.mxu0 0
        %1276 = vmatpush.bf16.msra.mxu0 0
        %1277 = vmatpush.bf16.msra.mxu0 %v1230
        %1278 = vmatpush.bf16.msra.mxu0 %v1228
        %1279 = vmatpush.bf16.msra.mxu0 %v1226
        %1280 = vmatpush.bf16.msra.mxu0 %v1224
        %1281 = vmatmul.bf16.gmra.mxu0 %v1257
        %v1282 = vpop.f32.mrf.mxu0
        %v1283 = vadd.f32 %v1269, %v1282
        %v1284 = vpop.f32.mrf.mxu0
        %v1285 = vadd.f32 %v1271, %v1284
        %1286 = vdwg.mxu0
        %1287 = vmatpush.bf16.msra.mxu0 %v1223
        %1288 = vmatpush.bf16.msra.mxu0 %v1221
        %1289 = vmatpush.bf16.msra.mxu0 %v1219
        %1290 = vmatpush.bf16.msra.mxu0 %v1217
        %1291 = vmatpush.bf16.msra.mxu0 %v1215
        %1292 = vmatpush.bf16.msra.mxu0 %v1213
        %1293 = vmatpush.bf16.msra.mxu0 %v1211
        %1294 = vmatpush.bf16.msra.mxu0 %v1209
        %1295 = vmatmul.bf16.gmra.mxu0 %v1110
        %v1296 = vpop.f32.mrf.mxu0
        %v1297 = vadd.f32 0.0, %v1296
        %v1298 = vpop.f32.mrf.mxu0
        %v1299 = vadd.f32 0.0, %v1298
        %1300 = vdwg.mxu0
        %1301 = vmatpush.bf16.msra.mxu0 0
        %1302 = vmatpush.bf16.msra.mxu0 0
        %1303 = vmatpush.bf16.msra.mxu0 0
        %1304 = vmatpush.bf16.msra.mxu0 0
        %1305 = vmatpush.bf16.msra.mxu0 %v1231
        %1306 = vmatpush.bf16.msra.mxu0 %v1229
        %1307 = vmatpush.bf16.msra.mxu0 %v1227
        %1308 = vmatpush.bf16.msra.mxu0 %v1225
        %1309 = vmatmul.bf16.gmra.mxu0 %v1257
        %v1310 = vpop.f32.mrf.mxu0
        %v1311 = vadd.f32 %v1297, %v1310
        %v1312 = vpop.f32.mrf.mxu0
        %v1313 = vadd.f32 %v1299, %v1312
        %1314 = vdwg.mxu0
        %v1315 = vxor.u32 %v1049, 2147483648
        %v1316 = vxor.u32 %v1063, 2147483648
        %v1317 = vxor.u32 %v1051, 2147483648
        %v1318 = vxor.u32 %v1065, 2147483648
        %v1319 = vmul.f32 %v1315, 1.442695
        %v1320 = vpow.pop %v1319
        %v1321 = vmul.f32 %v1316, 1.442695
        %v1322 = vpow.pop %v1321
        %v1323 = vmul.f32 %v1317, 1.442695
        %v1324 = vpow.pop %v1323
        %v1325 = vmul.f32 %v1318, 1.442695
        %v1326 = vpow.pop %v1325
        %v1327 = vadd.f32 %v1320, 1.0
        %v1328 = vadd.f32 %v1322, 1.0
        %v1329 = vadd.f32 %v1324, 1.0
        %v1330 = vadd.f32 %v1326, 1.0
        %v1331 = vrcp.pop %v1327
        %v1332 = vmul.f32 %v1327, %v1331
        %v1333 = vsub.f32 1.0, %v1332
        %v1334 = vmul.f32 %v1331, %v1333
        %v1335 = vadd.f32 %v1331, %v1334
        %vm1336 = vweird.f32 %v1327
        %vm1337 = vweird.f32 %v1331
        %vm1338 = vmor %vm1336, %vm1337
        %v1339 = vsel %vm1338, %v1331, %v1335
        %v1340 = vand.u32 2147483647, %v1327
        %vm1341 = vcmp.eq.f32.partialorder %v1340, 8.507059e+37
        %v1342 = vand.u32 %v1327, 2147483648
        %v1343 = vor.u32 1.1754944e-38, %v1342
        %v1344 = vsel %vm1341, %v1343, %v1339
        %v1345 = vmul.f32 1.0, %v1344
        %v1346 = vrcp.pop %v1328
        %v1347 = vmul.f32 %v1328, %v1346
        %v1348 = vsub.f32 1.0, %v1347
        %v1349 = vmul.f32 %v1346, %v1348
        %v1350 = vadd.f32 %v1346, %v1349
        %vm1351 = vweird.f32 %v1328
        %vm1352 = vweird.f32 %v1346
        %vm1353 = vmor %vm1351, %vm1352
        %v1354 = vsel %vm1353, %v1346, %v1350
        %v1355 = vand.u32 2147483647, %v1328
        %vm1356 = vcmp.eq.f32.partialorder %v1355, 8.507059e+37
        %v1357 = vand.u32 %v1328, 2147483648
        %v1358 = vor.u32 1.1754944e-38, %v1357
        %v1359 = vsel %vm1356, %v1358, %v1354
        %v1360 = vmul.f32 1.0, %v1359
        %v1361 = vrcp.pop %v1329
        %v1362 = vmul.f32 %v1329, %v1361
        %v1363 = vsub.f32 1.0, %v1362
        %v1364 = vmul.f32 %v1361, %v1363
        %v1365 = vadd.f32 %v1361, %v1364
        %vm1366 = vweird.f32 %v1329
        %vm1367 = vweird.f32 %v1361
        %vm1368 = vmor %vm1366, %vm1367
        %v1369 = vsel %vm1368, %v1361, %v1365
        %v1370 = vand.u32 2147483647, %v1329
        %vm1371 = vcmp.eq.f32.partialorder %v1370, 8.507059e+37
        %v1372 = vand.u32 %v1329, 2147483648
        %v1373 = vor.u32 1.1754944e-38, %v1372
        %v1374 = vsel %vm1371, %v1373, %v1369
        %v1375 = vmul.f32 1.0, %v1374
        %v1376 = vrcp.pop %v1330
        %v1377 = vmul.f32 %v1330, %v1376
        %v1378 = vsub.f32 1.0, %v1377
        %v1379 = vmul.f32 %v1376, %v1378
        %v1380 = vadd.f32 %v1376, %v1379
        %vm1381 = vweird.f32 %v1330
        %vm1382 = vweird.f32 %v1376
        %vm1383 = vmor %vm1381, %vm1382
        %v1384 = vsel %vm1383, %v1376, %v1380
        %v1385 = vand.u32 2147483647, %v1330
        %vm1386 = vcmp.eq.f32.partialorder %v1385, 8.507059e+37
        %v1387 = vand.u32 %v1330, 2147483648
        %v1388 = vor.u32 1.1754944e-38, %v1387
        %v1389 = vsel %vm1386, %v1388, %v1384
        %v1390 = vmul.f32 1.0, %v1389
        %v1391 = vmul.f32 %v458, %v1345
        %v1392 = vmul.f32 %v459, %v1360
        %v1393 = vmul.f32 %v460, %v1375
        %v1394 = vmul.f32 %v461, %v1390
        %v1395 = vxor.u32 %v1283, 2147483648
        %v1396 = vxor.u32 %v1311, 2147483648
        %v1397 = vxor.u32 %v1285, 2147483648
        %v1398 = vxor.u32 %v1313, 2147483648
        %v1399 = vmul.f32 %v1395, 1.442695
        %v1400 = vpow.pop %v1399
        %v1401 = vmul.f32 %v1396, 1.442695
        %v1402 = vpow.pop %v1401
        %v1403 = vmul.f32 %v1397, 1.442695
        %v1404 = vpow.pop %v1403
        %v1405 = vmul.f32 %v1398, 1.442695
        %v1406 = vpow.pop %v1405
        %v1407 = vadd.f32 %v1400, 1.0
        %v1408 = vadd.f32 %v1402, 1.0
        %v1409 = vadd.f32 %v1404, 1.0
        %v1410 = vadd.f32 %v1406, 1.0
        %v1411 = vrcp.pop %v1407
        %v1412 = vmul.f32 %v1407, %v1411
        %v1413 = vsub.f32 1.0, %v1412
        %v1414 = vmul.f32 %v1411, %v1413
        %v1415 = vadd.f32 %v1411, %v1414
        %vm1416 = vweird.f32 %v1407
        %vm1417 = vweird.f32 %v1411
        %vm1418 = vmor %vm1416, %vm1417
        %v1419 = vsel %vm1418, %v1411, %v1415
        %v1420 = vand.u32 2147483647, %v1407
        %vm1421 = vcmp.eq.f32.partialorder %v1420, 8.507059e+37
        %v1422 = vand.u32 %v1407, 2147483648
        %v1423 = vor.u32 1.1754944e-38, %v1422
        %v1424 = vsel %vm1421, %v1423, %v1419
        %v1425 = vmul.f32 1.0, %v1424
        %v1426 = vrcp.pop %v1408
        %v1427 = vmul.f32 %v1408, %v1426
        %v1428 = vsub.f32 1.0, %v1427
        %v1429 = vmul.f32 %v1426, %v1428
        %v1430 = vadd.f32 %v1426, %v1429
        %vm1431 = vweird.f32 %v1408
        %vm1432 = vweird.f32 %v1426
        %vm1433 = vmor %vm1431, %vm1432
        %v1434 = vsel %vm1433, %v1426, %v1430
        %v1435 = vand.u32 2147483647, %v1408
        %vm1436 = vcmp.eq.f32.partialorder %v1435, 8.507059e+37
        %v1437 = vand.u32 %v1408, 2147483648
        %v1438 = vor.u32 1.1754944e-38, %v1437
        %v1439 = vsel %vm1436, %v1438, %v1434
        %v1440 = vmul.f32 1.0, %v1439
        %v1441 = vrcp.pop %v1409
        %v1442 = vmul.f32 %v1409, %v1441
        %v1443 = vsub.f32 1.0, %v1442
        %v1444 = vmul.f32 %v1441, %v1443
        %v1445 = vadd.f32 %v1441, %v1444
        %vm1446 = vweird.f32 %v1409
        %vm1447 = vweird.f32 %v1441
        %vm1448 = vmor %vm1446, %vm1447
        %v1449 = vsel %vm1448, %v1441, %v1445
        %v1450 = vand.u32 2147483647, %v1409
        %vm1451 = vcmp.eq.f32.partialorder %v1450, 8.507059e+37
        %v1452 = vand.u32 %v1409, 2147483648
        %v1453 = vor.u32 1.1754944e-38, %v1452
        %v1454 = vsel %vm1451, %v1453, %v1449
        %v1455 = vmul.f32 1.0, %v1454
        %v1456 = vrcp.pop %v1410
        %v1457 = vmul.f32 %v1410, %v1456
        %v1458 = vsub.f32 1.0, %v1457
        %v1459 = vmul.f32 %v1456, %v1458
        %v1460 = vadd.f32 %v1456, %v1459
        %vm1461 = vweird.f32 %v1410
        %vm1462 = vweird.f32 %v1456
        %vm1463 = vmor %vm1461, %vm1462
        %v1464 = vsel %vm1463, %v1456, %v1460
        %v1465 = vand.u32 2147483647, %v1410
        %vm1466 = vcmp.eq.f32.partialorder %v1465, 8.507059e+37
        %v1467 = vand.u32 %v1410, 2147483648
        %v1468 = vor.u32 1.1754944e-38, %v1467
        %v1469 = vsel %vm1466, %v1468, %v1464
        %v1470 = vmul.f32 1.0, %v1469
        %v1471 = vmul.f32 %v498, %v1425
        %v1472 = vmul.f32 %v499, %v1440
        %v1473 = vmul.f32 %v500, %v1455
        %v1474 = vmul.f32 %v501, %v1470
        %v1475 = vadd.f32 %v1391, %v1471
        %v1476 = vadd.f32 %v1392, %v1472
        %v1477 = vadd.f32 %v1393, %v1473
        %v1478 = vadd.f32 %v1394, %v1474
        %v1479 = vrot.slane %v1475, 4
        %v1480 = vmax.f32 %v1475, %v1479
        %v1481 = vrot.slane %v1480, 2
        %v1482 = vmax.f32 %v1480, %v1481
        %v1483 = vrot.slane %v1482, 1
        %v1484 = vmax.f32 %v1482, %v1483
        %v1485 = vrot.slane %v1476, 4
        %v1486 = vmax.f32 %v1476, %v1485
        %v1487 = vrot.slane %v1486, 2
        %v1488 = vmax.f32 %v1486, %v1487
        %v1489 = vrot.slane %v1488, 1
        %v1490 = vmax.f32 %v1488, %v1489
        %v1491 = vrot.slane %v1477, 4
        %v1492 = vmax.f32 %v1477, %v1491
        %v1493 = vrot.slane %v1492, 2
        %v1494 = vmax.f32 %v1492, %v1493
        %v1495 = vrot.slane %v1494, 1
        %v1496 = vmax.f32 %v1494, %v1495
        %v1497 = vrot.slane %v1478, 4
        %v1498 = vmax.f32 %v1478, %v1497
        %v1499 = vrot.slane %v1498, 2
        %v1500 = vmax.f32 %v1498, %v1499
        %v1501 = vrot.slane %v1500, 1
        %v1502 = vmax.f32 %v1500, %v1501
        %v1507 = vrot.slane %v1490, 6
        %v1508 = vrot.slane %v1502, 6
        %vm1509 = vcmask 1041408
        %v1510 = vsel %vm1509, %v1484, %v1507
        %v1511 = vsel %vm1509, %v1496, %v1508
        %vm1512 = vcmask 1044484
        %v1513 = vsel %vm1512, %v1510, %v1510
        %vm1514 = vcmask 1046534
        %v1515 = vsel %vm1514, %v1510, %v1513
        %v1516 = vrot.slane %v1511, 7
        %vm1517 = vcmask 1041409
        %v1518 = vsel %vm1517, %v1516, %v1515
        %vm1519 = vcmask 1043459
        %v1520 = vsel %vm1519, %v1516, %v1518
        %vm1521 = vcmask 1045509
        %v1522 = vsel %vm1521, %v1516, %v1520
        %vm1523 = vcmask 1047559
        %v1524 = vsel %vm1523, %v1516, %v1522
        %1526 = vst [vmem:[%s312] sm:$0xf] %v1524
        %s1527 = smul.u32 2, %s19
        %p1528 = scmp.lt.s32.totalorder %s20, 0
        %s1529 = scalar_select %p1528, %s20, 0
        %p1530 = scmp.lt.s32.totalorder %s1527, 3
        %s1531 = scalar_select %p1530, %s1527, 3
        %s1532 = smul.addr %s1529, 4
        %s1533 = sadd.s32 %s1531, %s1532
        %s1534 = smul.addr %s1533, 2
        %s1535 = scalar_lea.vmem %s4, %s1534
        // Predicated region
        $region60: #{temporal_feature_aggregator.1} parent=54 // pred_check
          %p1536 = pneg %p153
        $region61: #{temporal_feature_aggregator.1} parent=54 // pred_check_branch
          %1538 = sbr.rel (%p1536) target = $region63
        $region62: #{temporal_feature_aggregator.1} parent=54 // pred_region
          %s1539 = smul.u32 2, %s19
        $region63: #{temporal_feature_aggregator.1} parent=54 // pred_fallthru
          _
      $region55: #{temporal_feature_aggregator.1} parent=5 // pred_fallthru
        _
      %p1540 = scmp.le.s32.totalorder 2, %s10
      // Predicated region
      $region64: #{temporal_feature_aggregator.1} parent=5 // pred_check
        %p1541 = pneg %p1540
      $region65: #{temporal_feature_aggregator.1} parent=5 // pred_check_branch
        %1543 = sbr.rel (%p1541) target = $region67
      $region66: #{temporal_feature_aggregator.1} parent=5 // pred_region
        %s1544 = ssub.s32 %s10, 2
        // Predicated region
        $region68: #{temporal_feature_aggregator.1} parent=66 // pred_check
          %p1545 = pneg %p159
        $region69: #{temporal_feature_aggregator.1} parent=66 // pred_check_branch
          %1547 = sbr.rel (%p1545) target = $region71
        $region70: #{temporal_feature_aggregator.1} parent=66 // pred_region
          %s1548 = smul.u32 2, %s21
          %p1549 = scmp.lt.s32.totalorder %s22, 0
          %s1550 = scalar_select %p1549, %s22, 0
          %p1551 = scmp.lt.s32.totalorder %s1548, 3
          %s1552 = scalar_select %p1551, %s1548, 3
          %s1553 = smul.addr %s1550, 4
          %s1554 = sadd.s32 %s1552, %s1553
          %s1555 = smul.addr %s1554, 2
          %s1556 = scalar_lea.vmem %s4, %s1555
        $region71: #{temporal_feature_aggregator.1} parent=66 // pred_fallthru
          _
      $region67: #{temporal_feature_aggregator.1} parent=5 // pred_fallthru
        _
    $region6: #{temporal_feature_aggregator.1} parent=1 // loop_footer
      %s14 = sadd.s32 1, %s10
    $region7: #{temporal_feature_aggregator.1} parent=1 // loop_footer_branch
      %9 = sbr.rel target = $region3
    $region8: #{temporal_feature_aggregator.1} parent=1 // loop_exit
      _

</llo_original>
